<compile_context>
chip_gen: v5e
topology: v5e:2x2
jax: 0.10.0
libtpu: 0.0.40
codegen_flags: <defaults>
</compile_context>

<pallas_src>
import functools

import jax
import jax.numpy as jnp
from jax.experimental import pallas as pl
from jax.experimental.pallas import tpu as pltpu

BN_EPS = 1e-5
GIN_EPS = 0.0          # GINConv default eps, train_eps=False
NUM_LAYERS = 5
LANE = 128             # pad feature/hidden widths to a full vreg lane


# ----------------------------------------------------------------------------
# Fused kernel: 5 x (aggregate -> Linear -> BN -> ReLU -> Linear -> ReLU)
# followed by mean pooling, all resident in VMEM.
# ----------------------------------------------------------------------------
def gin_fused_kernel(adj_ref, x_ref, w1_ref, gamma_ref, beta_ref,
                     w2_ref, b2_ref, pool_ref, invc_ref, o_ref):
    n = x_ref.shape[0]
    inv_n = jnp.float32(1.0 / n)

    adj = adj_ref[...]                                        # (N, N) bf16, exact 0/1
    h = x_ref[...]                                            # (N, LANE) f32

    for l in range(NUM_LAYERS):                               # static unroll (5)
        # Neighborhood sum aggregation: bf16 MXU pass, f32 accumulate.
        agg = jnp.dot(adj, h.astype(jnp.bfloat16),
                      preferred_element_type=jnp.float32)
        if GIN_EPS:
            h = (1.0 + GIN_EPS) * h + agg
        else:
            h = h + agg

        # Linear 1 (bias dropped: it cancels exactly under the BatchNorm below).
        h = jnp.dot(h.astype(jnp.bfloat16), w1_ref[l],
                    preferred_element_type=jnp.float32)

        # BatchNorm1d, training mode (biased batch stats over node axis),
        # one-pass: var = E[h^2] - mean^2 (f32).
        s = jnp.sum(h, axis=0, keepdims=True)
        ss = jnp.sum(h * h, axis=0, keepdims=True)
        mean = s * inv_n
        var = jnp.maximum(ss * inv_n - mean * mean, 0.0)
        h = (h - mean) * jax.lax.rsqrt(var + BN_EPS)
        h = h * gamma_ref[l] + beta_ref[l]

        # ReLU
        h = jnp.maximum(h, 0.0)

        # Linear 2 + ReLU
        h = jnp.dot(h.astype(jnp.bfloat16), w2_ref[l],
                    preferred_element_type=jnp.float32) + b2_ref[l]
        h = jnp.maximum(h, 0.0)

    # segment_csr mean pooling: exact 0/1 membership matmul (bf16 MXU pass),
    # then f32 scale by 1/count.
    pooled = jnp.dot(pool_ref[...], h.astype(jnp.bfloat16),
                     preferred_element_type=jnp.float32)
    o_ref[...] = pooled * invc_ref[...]


def _pad_to(a, shape):
    return jnp.pad(a, [(0, t - s) for s, t in zip(a.shape, shape)])


@functools.partial(jax.jit, static_argnames=("num_graphs", "n_hidden"))
def gin_forward(x_pad, adj_bf16, pool_mem, inv_counts, stacked,
                *, num_graphs, n_hidden):
    gp = pool_mem.shape[0]
    vmem = pl.BlockSpec(memory_space=pltpu.MemorySpace.VMEM)
    out = pl.pallas_call(
        gin_fused_kernel,
        out_shape=jax.ShapeDtypeStruct((gp, LANE), jnp.float32),
        in_specs=[vmem] * 9,
        out_specs=vmem,
    )(adj_bf16, x_pad, stacked["w1"], stacked["gamma"], stacked["beta"],
      stacked["w2"], stacked["b2"], pool_mem, inv_counts)
    return out[:num_graphs, :n_hidden]


# ----------------------------------------------------------------------------
# Parameter construction, padding / stacking, pooling matrix, reference.
# ----------------------------------------------------------------------------
def make_layer_params(key, in_dim, hidden):
    k1, k2, k3, k4 = jax.random.split(key, 4)
    s1 = 1.0 / jnp.sqrt(jnp.float32(in_dim))
    s2 = 1.0 / jnp.sqrt(jnp.float32(hidden))
    return {
        "w1": jax.random.uniform(k1, (in_dim, hidden), jnp.float32, -s1, s1),
        "b1": jax.random.uniform(k2, (1, hidden), jnp.float32, -s1, s1),
        "gamma": jnp.ones((1, hidden), jnp.float32),
        "beta": jnp.zeros((1, hidden), jnp.float32),
        "w2": jax.random.uniform(k3, (hidden, hidden), jnp.float32, -s2, s2),
        "b2": jax.random.uniform(k4, (1, hidden), jnp.float32, -s2, s2),
    }


def stack_and_pad_params(params_list):
    """Zero-pad params to (LANE, LANE)/(1, LANE), stack, weights to bf16.

    b1 is intentionally excluded: a bias added immediately before a batch-stat
    BatchNorm cancels exactly, so it is never sent to the kernel.
    """
    def pad_mat_bf16(m):
        return _pad_to(m, (LANE, LANE)).astype(jnp.bfloat16)

    def pad_vec(v):
        return _pad_to(v, (1, LANE))

    return {
        "w1": jnp.stack([pad_mat_bf16(p["w1"]) for p in params_list]),
        "gamma": jnp.stack([pad_vec(p["gamma"]) for p in params_list]),
        "beta": jnp.stack([pad_vec(p["beta"]) for p in params_list]),
        "w2": jnp.stack([pad_mat_bf16(p["w2"]) for p in params_list]),
        "b2": jnp.stack([pad_vec(p["b2"]) for p in params_list]),
    }


def build_pool_matrix(ptr, num_nodes, pad_rows):
    """Exact 0/1 membership matrix (bf16) + 1/count scale (f32) from CSR ptr."""
    ptr = jnp.asarray(ptr, jnp.int32)
    node_ids = jnp.arange(num_nodes)[None, :]
    starts = ptr[:-1][:, None]
    ends = ptr[1:][:, None]
    membership = ((node_ids >= starts) & (node_ids < ends)).astype(jnp.float32)
    counts = jnp.maximum(membership.sum(axis=1, keepdims=True), 1.0)   # (G, 1)
    mem_pad = _pad_to(membership, (pad_rows, num_nodes)).astype(jnp.bfloat16)
    invc_pad = _pad_to(1.0 / counts, (pad_rows, 1)).astype(jnp.float32)
    return mem_pad, invc_pad


def gin_reference(x, adj, params_list, ptr):
    """Pure-JAX f32 reference with the original (unpadded, un-fused) math."""
    hi = jax.lax.Precision.HIGHEST
    h = x
    for p in params_list:
        agg = jnp.dot(adj, h, precision=hi)
        h = (1.0 + GIN_EPS) * h + agg
        h = jnp.dot(h, p["w1"], precision=hi) + p["b1"]
        mean = jnp.mean(h, axis=0, keepdims=True)
        var = jnp.mean((h - mean) ** 2, axis=0, keepdims=True)
        h = (h - mean) / jnp.sqrt(var + BN_EPS)
        h = h * p["gamma"] + p["beta"]
        h = jnp.maximum(h, 0.0)
        h = jnp.dot(h, p["w2"], precision=hi) + p["b2"]
        h = jnp.maximum(h, 0.0)
    ptr = list(map(int, ptr))
    return jnp.stack([h[ptr[g]:ptr[g + 1]].mean(axis=0)
                      for g in range(len(ptr) - 1)])


if __name__ == "__main__":
    key = jax.random.PRNGKey(0)

    N = 128        # total nodes across the batch (multiple of 128 lanes)
    n_feat = 16    # args.n_feat
    n_hidden = 32  # args.n_hidden
    G = 8          # number of graphs in the batch (16 nodes each)
    G_PAD = 16     # pad graph rows to a full bf16 sublane group

    k_x, k_adj, k_p = jax.random.split(key, 3)

    # Node features (N, n_feat), zero-padded to (N, LANE) for the kernel.
    x = jax.random.normal(k_x, (N, n_feat), jnp.float32)
    x_pad = _pad_to(x, (N, LANE))

    # Random symmetric adjacency, no self loops. bf16 is exact for 0/1.
    a = (jax.random.uniform(k_adj, (N, N)) < 0.1).astype(jnp.float32)
    adj = jnp.maximum(a, a.T) * (1.0 - jnp.eye(N, dtype=jnp.float32))
    adj_bf16 = adj.astype(jnp.bfloat16)

    # segment_csr pointer: graphs of 16 nodes each.
    ptr = jnp.arange(0, N + 1, 16, dtype=jnp.int32)
    pool_mem, inv_counts = build_pool_matrix(ptr, N, G_PAD)

    # 5 GINConv layers: first maps n_feat -> n_hidden, rest n_hidden -> n_hidden.
    keys = jax.random.split(k_p, NUM_LAYERS)
    params_list = [make_layer_params(keys[0], n_feat, n_hidden)]
    for i in range(1, NUM_LAYERS):
        params_list.append(make_layer_params(keys[i], n_hidden, n_hidden))
    stacked = stack_and_pad_params(params_list)

    out = gin_forward(x_pad, adj_bf16, pool_mem, inv_counts, stacked,
                      num_graphs=G, n_hidden=n_hidden)
    out = jax.block_until_ready(out)

    assert out.shape == (G, n_hidden), out.shape
    assert bool(jnp.all(jnp.isfinite(out)))

    ref = gin_reference(x, adj, params_list, ptr)
    # Tolerance widened slightly vs the pure-f32 variant: matmul operands are
    # bf16 (f32 accumulate); BN renormalizes each layer so error stays small.
    max_err = float(jnp.max(jnp.abs(out - ref)))
    assert max_err < 3e-2, f"max abs error vs reference: {max_err}"

    print("KERNEL_OK")
</pallas_src>

<mosaic_0001>
module attributes {stable_mosaic.version = 11 : i64} {
  func.func @gin_fused_kernel(%arg0: memref<128x128xbf16, #tpu.memory_space<vmem>>, %arg1: memref<128x128xf32, #tpu.memory_space<vmem>>, %arg2: memref<5x128x128xbf16, #tpu.memory_space<vmem>>, %arg3: memref<5x1x128xf32, #tpu.memory_space<vmem>>, %arg4: memref<5x1x128xf32, #tpu.memory_space<vmem>>, %arg5: memref<5x128x128xbf16, #tpu.memory_space<vmem>>, %arg6: memref<5x1x128xf32, #tpu.memory_space<vmem>>, %arg7: memref<16x128xbf16, #tpu.memory_space<vmem>>, %arg8: memref<16x1xf32, #tpu.memory_space<vmem>>, %arg9: memref<16x128xf32, #tpu.memory_space<vmem>>) attributes {dimension_semantics = [], scalar_prefetch = 0 : i64, scratch_operands = 0 : i64, tpu.core_type = #tpu.core_type<tc>} {
    %c0 = arith.constant 0 : index
    %c0_0 = arith.constant 0 : index
    %0 = vector.load %arg0[%c0, %c0_0] : memref<128x128xbf16, #tpu.memory_space<vmem>>, vector<128x128xbf16>
    %c0_1 = arith.constant 0 : index
    %c0_2 = arith.constant 0 : index
    %1 = vector.load %arg1[%c0_1, %c0_2] : memref<128x128xf32, #tpu.memory_space<vmem>>, vector<128x128xf32>
    %2 = arith.truncf %1 : vector<128x128xf32> to vector<128x128xbf16>
    %cst = arith.constant dense<0.000000e+00> : vector<128x128xf32>
    %3 = tpu.matmul %0, %2, %cst {dimension_numbers = #tpu.dot_dimension_numbers<[1], [0], [0], [1], [0, 0, 1, 1], [], []>} : vector<128x128xbf16>, vector<128x128xbf16>, vector<128x128xf32> -> vector<128x128xf32>
    %4 = arith.addf %1, %3 : vector<128x128xf32>
    %5 = arith.truncf %4 : vector<128x128xf32> to vector<128x128xbf16>
    %c0_3 = arith.constant 0 : index
    %c0_4 = arith.constant 0 : index
    %c0_5 = arith.constant 0 : index
    %6 = vector.load %arg2[%c0_3, %c0_4, %c0_5] : memref<5x128x128xbf16, #tpu.memory_space<vmem>>, vector<1x128x128xbf16>
    %7 = vector.shape_cast %6 : vector<1x128x128xbf16> to vector<128x128xbf16>
    %cst_6 = arith.constant dense<0.000000e+00> : vector<128x128xf32>
    %8 = tpu.matmul %5, %7, %cst_6 {dimension_numbers = #tpu.dot_dimension_numbers<[1], [0], [0], [1], [0, 0, 1, 1], [], []>} : vector<128x128xbf16>, vector<128x128xbf16>, vector<128x128xf32> -> vector<128x128xf32>
    %cst_7 = arith.constant dense<0.000000e+00> : vector<128xf32>
    %9 = vector.multi_reduction <add>, %8, %cst_7 [0] : vector<128x128xf32> to vector<128xf32>
    %10 = vector.shape_cast %9 : vector<128xf32> to vector<1x128xf32>
    %11 = arith.mulf %8, %8 : vector<128x128xf32>
    %cst_8 = arith.constant dense<0.000000e+00> : vector<128xf32>
    %12 = vector.multi_reduction <add>, %11, %cst_8 [0] : vector<128x128xf32> to vector<128xf32>
    %13 = vector.shape_cast %12 : vector<128xf32> to vector<1x128xf32>
    %cst_9 = arith.constant 7.812500e-03 : f32
    %14 = vector.broadcast %cst_9 : f32 to vector<1x128xf32>
    %15 = arith.mulf %10, %14 : vector<1x128xf32>
    %cst_10 = arith.constant 7.812500e-03 : f32
    %16 = vector.broadcast %cst_10 : f32 to vector<1x128xf32>
    %17 = arith.mulf %13, %16 : vector<1x128xf32>
    %18 = arith.mulf %15, %15 : vector<1x128xf32>
    %19 = arith.subf %17, %18 : vector<1x128xf32>
    %cst_11 = arith.constant 0.000000e+00 : f32
    %20 = vector.broadcast %cst_11 : f32 to vector<1x128xf32>
    %21 = arith.maximumf %19, %20 : vector<1x128xf32>
    %22 = vector.broadcast %15 : vector<1x128xf32> to vector<128x128xf32>
    %23 = arith.subf %8, %22 : vector<128x128xf32>
    %cst_12 = arith.constant 9.99999974E-6 : f32
    %24 = vector.broadcast %cst_12 : f32 to vector<1x128xf32>
    %25 = arith.addf %21, %24 : vector<1x128xf32>
    %26 = math.rsqrt %25 : vector<1x128xf32>
    %27 = vector.broadcast %26 : vector<1x128xf32> to vector<128x128xf32>
    %28 = arith.mulf %23, %27 : vector<128x128xf32>
    %c0_13 = arith.constant 0 : index
    %c0_14 = arith.constant 0 : index
    %c0_15 = arith.constant 0 : index
    %29 = vector.load %arg3[%c0_13, %c0_14, %c0_15] : memref<5x1x128xf32, #tpu.memory_space<vmem>>, vector<1x1x128xf32>
    %30 = vector.shape_cast %29 : vector<1x1x128xf32> to vector<1x128xf32>
    %31 = vector.broadcast %30 : vector<1x128xf32> to vector<128x128xf32>
    %32 = arith.mulf %28, %31 : vector<128x128xf32>
    %c0_16 = arith.constant 0 : index
    %c0_17 = arith.constant 0 : index
    %c0_18 = arith.constant 0 : index
    %33 = vector.load %arg4[%c0_16, %c0_17, %c0_18] : memref<5x1x128xf32, #tpu.memory_space<vmem>>, vector<1x1x128xf32>
    %34 = vector.shape_cast %33 : vector<1x1x128xf32> to vector<1x128xf32>
    %35 = vector.broadcast %34 : vector<1x128xf32> to vector<128x128xf32>
    %36 = arith.addf %32, %35 : vector<128x128xf32>
    %cst_19 = arith.constant 0.000000e+00 : f32
    %37 = vector.broadcast %cst_19 : f32 to vector<128x128xf32>
    %38 = arith.maximumf %36, %37 : vector<128x128xf32>
    %39 = arith.truncf %38 : vector<128x128xf32> to vector<128x128xbf16>
    %c0_20 = arith.constant 0 : index
    %c0_21 = arith.constant 0 : index
    %c0_22 = arith.constant 0 : index
    %40 = vector.load %arg5[%c0_20, %c0_21, %c0_22] : memref<5x128x128xbf16, #tpu.memory_space<vmem>>, vector<1x128x128xbf16>
    %41 = vector.shape_cast %40 : vector<1x128x128xbf16> to vector<128x128xbf16>
    %cst_23 = arith.constant dense<0.000000e+00> : vector<128x128xf32>
    %42 = tpu.matmul %39, %41, %cst_23 {dimension_numbers = #tpu.dot_dimension_numbers<[1], [0], [0], [1], [0, 0, 1, 1], [], []>} : vector<128x128xbf16>, vector<128x128xbf16>, vector<128x128xf32> -> vector<128x128xf32>
    %c0_24 = arith.constant 0 : index
    %c0_25 = arith.constant 0 : index
    %c0_26 = arith.constant 0 : index
    %43 = vector.load %arg6[%c0_24, %c0_25, %c0_26] : memref<5x1x128xf32, #tpu.memory_space<vmem>>, vector<1x1x128xf32>
    %44 = vector.shape_cast %43 : vector<1x1x128xf32> to vector<1x128xf32>
    %45 = vector.broadcast %44 : vector<1x128xf32> to vector<128x128xf32>
    %46 = arith.addf %42, %45 : vector<128x128xf32>
    %cst_27 = arith.constant 0.000000e+00 : f32
    %47 = vector.broadcast %cst_27 : f32 to vector<128x128xf32>
    %48 = arith.maximumf %46, %47 : vector<128x128xf32>
    %49 = arith.truncf %48 : vector<128x128xf32> to vector<128x128xbf16>
    %cst_28 = arith.constant dense<0.000000e+00> : vector<128x128xf32>
    %50 = tpu.matmul %0, %49, %cst_28 {dimension_numbers = #tpu.dot_dimension_numbers<[1], [0], [0], [1], [0, 0, 1, 1], [], []>} : vector<128x128xbf16>, vector<128x128xbf16>, vector<128x128xf32> -> vector<128x128xf32>
    %51 = arith.addf %48, %50 : vector<128x128xf32>
    %52 = arith.truncf %51 : vector<128x128xf32> to vector<128x128xbf16>
    %c1 = arith.constant 1 : index
    %c0_29 = arith.constant 0 : index
    %c0_30 = arith.constant 0 : index
    %53 = vector.load %arg2[%c1, %c0_29, %c0_30] : memref<5x128x128xbf16, #tpu.memory_space<vmem>>, vector<1x128x128xbf16>
    %54 = vector.shape_cast %53 : vector<1x128x128xbf16> to vector<128x128xbf16>
    %cst_31 = arith.constant dense<0.000000e+00> : vector<128x128xf32>
    %55 = tpu.matmul %52, %54, %cst_31 {dimension_numbers = #tpu.dot_dimension_numbers<[1], [0], [0], [1], [0, 0, 1, 1], [], []>} : vector<128x128xbf16>, vector<128x128xbf16>, vector<128x128xf32> -> vector<128x128xf32>
    %cst_32 = arith.constant dense<0.000000e+00> : vector<128xf32>
    %56 = vector.multi_reduction <add>, %55, %cst_32 [0] : vector<128x128xf32> to vector<128xf32>
    %57 = vector.shape_cast %56 : vector<128xf32> to vector<1x128xf32>
    %58 = arith.mulf %55, %55 : vector<128x128xf32>
    %cst_33 = arith.constant dense<0.000000e+00> : vector<128xf32>
    %59 = vector.multi_reduction <add>, %58, %cst_33 [0] : vector<128x128xf32> to vector<128xf32>
    %60 = vector.shape_cast %59 : vector<128xf32> to vector<1x128xf32>
    %cst_34 = arith.constant 7.812500e-03 : f32
    %61 = vector.broadcast %cst_34 : f32 to vector<1x128xf32>
    %62 = arith.mulf %57, %61 : vector<1x128xf32>
    %cst_35 = arith.constant 7.812500e-03 : f32
    %63 = vector.broadcast %cst_35 : f32 to vector<1x128xf32>
    %64 = arith.mulf %60, %63 : vector<1x128xf32>
    %65 = arith.mulf %62, %62 : vector<1x128xf32>
    %66 = arith.subf %64, %65 : vector<1x128xf32>
    %cst_36 = arith.constant 0.000000e+00 : f32
    %67 = vector.broadcast %cst_36 : f32 to vector<1x128xf32>
    %68 = arith.maximumf %66, %67 : vector<1x128xf32>
    %69 = vector.broadcast %62 : vector<1x128xf32> to vector<128x128xf32>
    %70 = arith.subf %55, %69 : vector<128x128xf32>
    %cst_37 = arith.constant 9.99999974E-6 : f32
    %71 = vector.broadcast %cst_37 : f32 to vector<1x128xf32>
    %72 = arith.addf %68, %71 : vector<1x128xf32>
    %73 = math.rsqrt %72 : vector<1x128xf32>
    %74 = vector.broadcast %73 : vector<1x128xf32> to vector<128x128xf32>
    %75 = arith.mulf %70, %74 : vector<128x128xf32>
    %c1_38 = arith.constant 1 : index
    %c0_39 = arith.constant 0 : index
    %c0_40 = arith.constant 0 : index
    %76 = vector.load %arg3[%c1_38, %c0_39, %c0_40] : memref<5x1x128xf32, #tpu.memory_space<vmem>>, vector<1x1x128xf32>
    %77 = vector.shape_cast %76 : vector<1x1x128xf32> to vector<1x128xf32>
    %78 = vector.broadcast %77 : vector<1x128xf32> to vector<128x128xf32>
    %79 = arith.mulf %75, %78 : vector<128x128xf32>
    %c1_41 = arith.constant 1 : index
    %c0_42 = arith.constant 0 : index
    %c0_43 = arith.constant 0 : index
    %80 = vector.load %arg4[%c1_41, %c0_42, %c0_43] : memref<5x1x128xf32, #tpu.memory_space<vmem>>, vector<1x1x128xf32>
    %81 = vector.shape_cast %80 : vector<1x1x128xf32> to vector<1x128xf32>
    %82 = vector.broadcast %81 : vector<1x128xf32> to vector<128x128xf32>
    %83 = arith.addf %79, %82 : vector<128x128xf32>
    %cst_44 = arith.constant 0.000000e+00 : f32
    %84 = vector.broadcast %cst_44 : f32 to vector<128x128xf32>
    %85 = arith.maximumf %83, %84 : vector<128x128xf32>
    %86 = arith.truncf %85 : vector<128x128xf32> to vector<128x128xbf16>
    %c1_45 = arith.constant 1 : index
    %c0_46 = arith.constant 0 : index
    %c0_47 = arith.constant 0 : index
    %87 = vector.load %arg5[%c1_45, %c0_46, %c0_47] : memref<5x128x128xbf16, #tpu.memory_space<vmem>>, vector<1x128x128xbf16>
    %88 = vector.shape_cast %87 : vector<1x128x128xbf16> to vector<128x128xbf16>
    %cst_48 = arith.constant dense<0.000000e+00> : vector<128x128xf32>
    %89 = tpu.matmul %86, %88, %cst_48 {dimension_numbers = #tpu.dot_dimension_numbers<[1], [0], [0], [1], [0, 0, 1, 1], [], []>} : vector<128x128xbf16>, vector<128x128xbf16>, vector<128x128xf32> -> vector<128x128xf32>
    %c1_49 = arith.constant 1 : index
    %c0_50 = arith.constant 0 : index
    %c0_51 = arith.constant 0 : index
    %90 = vector.load %arg6[%c1_49, %c0_50, %c0_51] : memref<5x1x128xf32, #tpu.memory_space<vmem>>, vector<1x1x128xf32>
    %91 = vector.shape_cast %90 : vector<1x1x128xf32> to vector<1x128xf32>
    %92 = vector.broadcast %91 : vector<1x128xf32> to vector<128x128xf32>
    %93 = arith.addf %89, %92 : vector<128x128xf32>
    %cst_52 = arith.constant 0.000000e+00 : f32
    %94 = vector.broadcast %cst_52 : f32 to vector<128x128xf32>
    %95 = arith.maximumf %93, %94 : vector<128x128xf32>
    %96 = arith.truncf %95 : vector<128x128xf32> to vector<128x128xbf16>
    %cst_53 = arith.constant dense<0.000000e+00> : vector<128x128xf32>
    %97 = tpu.matmul %0, %96, %cst_53 {dimension_numbers = #tpu.dot_dimension_numbers<[1], [0], [0], [1], [0, 0, 1, 1], [], []>} : vector<128x128xbf16>, vector<128x128xbf16>, vector<128x128xf32> -> vector<128x128xf32>
    %98 = arith.addf %95, %97 : vector<128x128xf32>
    %99 = arith.truncf %98 : vector<128x128xf32> to vector<128x128xbf16>
    %c2 = arith.constant 2 : index
    %c0_54 = arith.constant 0 : index
    %c0_55 = arith.constant 0 : index
    %100 = vector.load %arg2[%c2, %c0_54, %c0_55] : memref<5x128x128xbf16, #tpu.memory_space<vmem>>, vector<1x128x128xbf16>
    %101 = vector.shape_cast %100 : vector<1x128x128xbf16> to vector<128x128xbf16>
    %cst_56 = arith.constant dense<0.000000e+00> : vector<128x128xf32>
    %102 = tpu.matmul %99, %101, %cst_56 {dimension_numbers = #tpu.dot_dimension_numbers<[1], [0], [0], [1], [0, 0, 1, 1], [], []>} : vector<128x128xbf16>, vector<128x128xbf16>, vector<128x128xf32> -> vector<128x128xf32>
    %cst_57 = arith.constant dense<0.000000e+00> : vector<128xf32>
    %103 = vector.multi_reduction <add>, %102, %cst_57 [0] : vector<128x128xf32> to vector<128xf32>
    %104 = vector.shape_cast %103 : vector<128xf32> to vector<1x128xf32>
    %105 = arith.mulf %102, %102 : vector<128x128xf32>
    %cst_58 = arith.constant dense<0.000000e+00> : vector<128xf32>
    %106 = vector.multi_reduction <add>, %105, %cst_58 [0] : vector<128x128xf32> to vector<128xf32>
    %107 = vector.shape_cast %106 : vector<128xf32> to vector<1x128xf32>
    %cst_59 = arith.constant 7.812500e-03 : f32
    %108 = vector.broadcast %cst_59 : f32 to vector<1x128xf32>
    %109 = arith.mulf %104, %108 : vector<1x128xf32>
    %cst_60 = arith.constant 7.812500e-03 : f32
    %110 = vector.broadcast %cst_60 : f32 to vector<1x128xf32>
    %111 = arith.mulf %107, %110 : vector<1x128xf32>
    %112 = arith.mulf %109, %109 : vector<1x128xf32>
    %113 = arith.subf %111, %112 : vector<1x128xf32>
    %cst_61 = arith.constant 0.000000e+00 : f32
    %114 = vector.broadcast %cst_61 : f32 to vector<1x128xf32>
    %115 = arith.maximumf %113, %114 : vector<1x128xf32>
    %116 = vector.broadcast %109 : vector<1x128xf32> to vector<128x128xf32>
    %117 = arith.subf %102, %116 : vector<128x128xf32>
    %cst_62 = arith.constant 9.99999974E-6 : f32
    %118 = vector.broadcast %cst_62 : f32 to vector<1x128xf32>
    %119 = arith.addf %115, %118 : vector<1x128xf32>
    %120 = math.rsqrt %119 : vector<1x128xf32>
    %121 = vector.broadcast %120 : vector<1x128xf32> to vector<128x128xf32>
    %122 = arith.mulf %117, %121 : vector<128x128xf32>
    %c2_63 = arith.constant 2 : index
    %c0_64 = arith.constant 0 : index
    %c0_65 = arith.constant 0 : index
    %123 = vector.load %arg3[%c2_63, %c0_64, %c0_65] : memref<5x1x128xf32, #tpu.memory_space<vmem>>, vector<1x1x128xf32>
    %124 = vector.shape_cast %123 : vector<1x1x128xf32> to vector<1x128xf32>
    %125 = vector.broadcast %124 : vector<1x128xf32> to vector<128x128xf32>
    %126 = arith.mulf %122, %125 : vector<128x128xf32>
    %c2_66 = arith.constant 2 : index
    %c0_67 = arith.constant 0 : index
    %c0_68 = arith.constant 0 : index
    %127 = vector.load %arg4[%c2_66, %c0_67, %c0_68] : memref<5x1x128xf32, #tpu.memory_space<vmem>>, vector<1x1x128xf32>
    %128 = vector.shape_cast %127 : vector<1x1x128xf32> to vector<1x128xf32>
    %129 = vector.broadcast %128 : vector<1x128xf32> to vector<128x128xf32>
    %130 = arith.addf %126, %129 : vector<128x128xf32>
    %cst_69 = arith.constant 0.000000e+00 : f32
    %131 = vector.broadcast %cst_69 : f32 to vector<128x128xf32>
    %132 = arith.maximumf %130, %131 : vector<128x128xf32>
    %133 = arith.truncf %132 : vector<128x128xf32> to vector<128x128xbf16>
    %c2_70 = arith.constant 2 : index
    %c0_71 = arith.constant 0 : index
    %c0_72 = arith.constant 0 : index
    %134 = vector.load %arg5[%c2_70, %c0_71, %c0_72] : memref<5x128x128xbf16, #tpu.memory_space<vmem>>, vector<1x128x128xbf16>
    %135 = vector.shape_cast %134 : vector<1x128x128xbf16> to vector<128x128xbf16>
    %cst_73 = arith.constant dense<0.000000e+00> : vector<128x128xf32>
    %136 = tpu.matmul %133, %135, %cst_73 {dimension_numbers = #tpu.dot_dimension_numbers<[1], [0], [0], [1], [0, 0, 1, 1], [], []>} : vector<128x128xbf16>, vector<128x128xbf16>, vector<128x128xf32> -> vector<128x128xf32>
    %c2_74 = arith.constant 2 : index
    %c0_75 = arith.constant 0 : index
    %c0_76 = arith.constant 0 : index
    %137 = vector.load %arg6[%c2_74, %c0_75, %c0_76] : memref<5x1x128xf32, #tpu.memory_space<vmem>>, vector<1x1x128xf32>
    %138 = vector.shape_cast %137 : vector<1x1x128xf32> to vector<1x128xf32>
    %139 = vector.broadcast %138 : vector<1x128xf32> to vector<128x128xf32>
    %140 = arith.addf %136, %139 : vector<128x128xf32>
    %cst_77 = arith.constant 0.000000e+00 : f32
    %141 = vector.broadcast %cst_77 : f32 to vector<128x128xf32>
    %142 = arith.maximumf %140, %141 : vector<128x128xf32>
    %143 = arith.truncf %142 : vector<128x128xf32> to vector<128x128xbf16>
    %cst_78 = arith.constant dense<0.000000e+00> : vector<128x128xf32>
    %144 = tpu.matmul %0, %143, %cst_78 {dimension_numbers = #tpu.dot_dimension_numbers<[1], [0], [0], [1], [0, 0, 1, 1], [], []>} : vector<128x128xbf16>, vector<128x128xbf16>, vector<128x128xf32> -> vector<128x128xf32>
    %145 = arith.addf %142, %144 : vector<128x128xf32>
    %146 = arith.truncf %145 : vector<128x128xf32> to vector<128x128xbf16>
    %c3 = arith.constant 3 : index
    %c0_79 = arith.constant 0 : index
    %c0_80 = arith.constant 0 : index
    %147 = vector.load %arg2[%c3, %c0_79, %c0_80] : memref<5x128x128xbf16, #tpu.memory_space<vmem>>, vector<1x128x128xbf16>
    %148 = vector.shape_cast %147 : vector<1x128x128xbf16> to vector<128x128xbf16>
    %cst_81 = arith.constant dense<0.000000e+00> : vector<128x128xf32>
    %149 = tpu.matmul %146, %148, %cst_81 {dimension_numbers = #tpu.dot_dimension_numbers<[1], [0], [0], [1], [0, 0, 1, 1], [], []>} : vector<128x128xbf16>, vector<128x128xbf16>, vector<128x128xf32> -> vector<128x128xf32>
    %cst_82 = arith.constant dense<0.000000e+00> : vector<128xf32>
    %150 = vector.multi_reduction <add>, %149, %cst_82 [0] : vector<128x128xf32> to vector<128xf32>
    %151 = vector.shape_cast %150 : vector<128xf32> to vector<1x128xf32>
    %152 = arith.mulf %149, %149 : vector<128x128xf32>
    %cst_83 = arith.constant dense<0.000000e+00> : vector<128xf32>
    %153 = vector.multi_reduction <add>, %152, %cst_83 [0] : vector<128x128xf32> to vector<128xf32>
    %154 = vector.shape_cast %153 : vector<128xf32> to vector<1x128xf32>
    %cst_84 = arith.constant 7.812500e-03 : f32
    %155 = vector.broadcast %cst_84 : f32 to vector<1x128xf32>
    %156 = arith.mulf %151, %155 : vector<1x128xf32>
    %cst_85 = arith.constant 7.812500e-03 : f32
    %157 = vector.broadcast %cst_85 : f32 to vector<1x128xf32>
    %158 = arith.mulf %154, %157 : vector<1x128xf32>
    %159 = arith.mulf %156, %156 : vector<1x128xf32>
    %160 = arith.subf %158, %159 : vector<1x128xf32>
    %cst_86 = arith.constant 0.000000e+00 : f32
    %161 = vector.broadcast %cst_86 : f32 to vector<1x128xf32>
    %162 = arith.maximumf %160, %161 : vector<1x128xf32>
    %163 = vector.broadcast %156 : vector<1x128xf32> to vector<128x128xf32>
    %164 = arith.subf %149, %163 : vector<128x128xf32>
    %cst_87 = arith.constant 9.99999974E-6 : f32
    %165 = vector.broadcast %cst_87 : f32 to vector<1x128xf32>
    %166 = arith.addf %162, %165 : vector<1x128xf32>
    %167 = math.rsqrt %166 : vector<1x128xf32>
    %168 = vector.broadcast %167 : vector<1x128xf32> to vector<128x128xf32>
    %169 = arith.mulf %164, %168 : vector<128x128xf32>
    %c3_88 = arith.constant 3 : index
    %c0_89 = arith.constant 0 : index
    %c0_90 = arith.constant 0 : index
    %170 = vector.load %arg3[%c3_88, %c0_89, %c0_90] : memref<5x1x128xf32, #tpu.memory_space<vmem>>, vector<1x1x128xf32>
    %171 = vector.shape_cast %170 : vector<1x1x128xf32> to vector<1x128xf32>
    %172 = vector.broadcast %171 : vector<1x128xf32> to vector<128x128xf32>
    %173 = arith.mulf %169, %172 : vector<128x128xf32>
    %c3_91 = arith.constant 3 : index
    %c0_92 = arith.constant 0 : index
    %c0_93 = arith.constant 0 : index
    %174 = vector.load %arg4[%c3_91, %c0_92, %c0_93] : memref<5x1x128xf32, #tpu.memory_space<vmem>>, vector<1x1x128xf32>
    %175 = vector.shape_cast %174 : vector<1x1x128xf32> to vector<1x128xf32>
    %176 = vector.broadcast %175 : vector<1x128xf32> to vector<128x128xf32>
    %177 = arith.addf %173, %176 : vector<128x128xf32>
    %cst_94 = arith.constant 0.000000e+00 : f32
    %178 = vector.broadcast %cst_94 : f32 to vector<128x128xf32>
    %179 = arith.maximumf %177, %178 : vector<128x128xf32>
    %180 = arith.truncf %179 : vector<128x128xf32> to vector<128x128xbf16>
    %c3_95 = arith.constant 3 : index
    %c0_96 = arith.constant 0 : index
    %c0_97 = arith.constant 0 : index
    %181 = vector.load %arg5[%c3_95, %c0_96, %c0_97] : memref<5x128x128xbf16, #tpu.memory_space<vmem>>, vector<1x128x128xbf16>
    %182 = vector.shape_cast %181 : vector<1x128x128xbf16> to vector<128x128xbf16>
    %cst_98 = arith.constant dense<0.000000e+00> : vector<128x128xf32>
    %183 = tpu.matmul %180, %182, %cst_98 {dimension_numbers = #tpu.dot_dimension_numbers<[1], [0], [0], [1], [0, 0, 1, 1], [], []>} : vector<128x128xbf16>, vector<128x128xbf16>, vector<128x128xf32> -> vector<128x128xf32>
    %c3_99 = arith.constant 3 : index
    %c0_100 = arith.constant 0 : index
    %c0_101 = arith.constant 0 : index
    %184 = vector.load %arg6[%c3_99, %c0_100, %c0_101] : memref<5x1x128xf32, #tpu.memory_space<vmem>>, vector<1x1x128xf32>
    %185 = vector.shape_cast %184 : vector<1x1x128xf32> to vector<1x128xf32>
    %186 = vector.broadcast %185 : vector<1x128xf32> to vector<128x128xf32>
    %187 = arith.addf %183, %186 : vector<128x128xf32>
    %cst_102 = arith.constant 0.000000e+00 : f32
    %188 = vector.broadcast %cst_102 : f32 to vector<128x128xf32>
    %189 = arith.maximumf %187, %188 : vector<128x128xf32>
    %190 = arith.truncf %189 : vector<128x128xf32> to vector<128x128xbf16>
    %cst_103 = arith.constant dense<0.000000e+00> : vector<128x128xf32>
    %191 = tpu.matmul %0, %190, %cst_103 {dimension_numbers = #tpu.dot_dimension_numbers<[1], [0], [0], [1], [0, 0, 1, 1], [], []>} : vector<128x128xbf16>, vector<128x128xbf16>, vector<128x128xf32> -> vector<128x128xf32>
    %192 = arith.addf %189, %191 : vector<128x128xf32>
    %193 = arith.truncf %192 : vector<128x128xf32> to vector<128x128xbf16>
    %c4 = arith.constant 4 : index
    %c0_104 = arith.constant 0 : index
    %c0_105 = arith.constant 0 : index
    %194 = vector.load %arg2[%c4, %c0_104, %c0_105] : memref<5x128x128xbf16, #tpu.memory_space<vmem>>, vector<1x128x128xbf16>
    %195 = vector.shape_cast %194 : vector<1x128x128xbf16> to vector<128x128xbf16>
    %cst_106 = arith.constant dense<0.000000e+00> : vector<128x128xf32>
    %196 = tpu.matmul %193, %195, %cst_106 {dimension_numbers = #tpu.dot_dimension_numbers<[1], [0], [0], [1], [0, 0, 1, 1], [], []>} : vector<128x128xbf16>, vector<128x128xbf16>, vector<128x128xf32> -> vector<128x128xf32>
    %cst_107 = arith.constant dense<0.000000e+00> : vector<128xf32>
    %197 = vector.multi_reduction <add>, %196, %cst_107 [0] : vector<128x128xf32> to vector<128xf32>
    %198 = vector.shape_cast %197 : vector<128xf32> to vector<1x128xf32>
    %199 = arith.mulf %196, %196 : vector<128x128xf32>
    %cst_108 = arith.constant dense<0.000000e+00> : vector<128xf32>
    %200 = vector.multi_reduction <add>, %199, %cst_108 [0] : vector<128x128xf32> to vector<128xf32>
    %201 = vector.shape_cast %200 : vector<128xf32> to vector<1x128xf32>
    %cst_109 = arith.constant 7.812500e-03 : f32
    %202 = vector.broadcast %cst_109 : f32 to vector<1x128xf32>
    %203 = arith.mulf %198, %202 : vector<1x128xf32>
    %cst_110 = arith.constant 7.812500e-03 : f32
    %204 = vector.broadcast %cst_110 : f32 to vector<1x128xf32>
    %205 = arith.mulf %201, %204 : vector<1x128xf32>
    %206 = arith.mulf %203, %203 : vector<1x128xf32>
    %207 = arith.subf %205, %206 : vector<1x128xf32>
    %cst_111 = arith.constant 0.000000e+00 : f32
    %208 = vector.broadcast %cst_111 : f32 to vector<1x128xf32>
    %209 = arith.maximumf %207, %208 : vector<1x128xf32>
    %210 = vector.broadcast %203 : vector<1x128xf32> to vector<128x128xf32>
    %211 = arith.subf %196, %210 : vector<128x128xf32>
    %cst_112 = arith.constant 9.99999974E-6 : f32
    %212 = vector.broadcast %cst_112 : f32 to vector<1x128xf32>
    %213 = arith.addf %209, %212 : vector<1x128xf32>
    %214 = math.rsqrt %213 : vector<1x128xf32>
    %215 = vector.broadcast %214 : vector<1x128xf32> to vector<128x128xf32>
    %216 = arith.mulf %211, %215 : vector<128x128xf32>
    %c4_113 = arith.constant 4 : index
    %c0_114 = arith.constant 0 : index
    %c0_115 = arith.constant 0 : index
    %217 = vector.load %arg3[%c4_113, %c0_114, %c0_115] : memref<5x1x128xf32, #tpu.memory_space<vmem>>, vector<1x1x128xf32>
    %218 = vector.shape_cast %217 : vector<1x1x128xf32> to vector<1x128xf32>
    %219 = vector.broadcast %218 : vector<1x128xf32> to vector<128x128xf32>
    %220 = arith.mulf %216, %219 : vector<128x128xf32>
    %c4_116 = arith.constant 4 : index
    %c0_117 = arith.constant 0 : index
    %c0_118 = arith.constant 0 : index
    %221 = vector.load %arg4[%c4_116, %c0_117, %c0_118] : memref<5x1x128xf32, #tpu.memory_space<vmem>>, vector<1x1x128xf32>
    %222 = vector.shape_cast %221 : vector<1x1x128xf32> to vector<1x128xf32>
    %223 = vector.broadcast %222 : vector<1x128xf32> to vector<128x128xf32>
    %224 = arith.addf %220, %223 : vector<128x128xf32>
    %cst_119 = arith.constant 0.000000e+00 : f32
    %225 = vector.broadcast %cst_119 : f32 to vector<128x128xf32>
    %226 = arith.maximumf %224, %225 : vector<128x128xf32>
    %227 = arith.truncf %226 : vector<128x128xf32> to vector<128x128xbf16>
    %c4_120 = arith.constant 4 : index
    %c0_121 = arith.constant 0 : index
    %c0_122 = arith.constant 0 : index
    %228 = vector.load %arg5[%c4_120, %c0_121, %c0_122] : memref<5x128x128xbf16, #tpu.memory_space<vmem>>, vector<1x128x128xbf16>
    %229 = vector.shape_cast %228 : vector<1x128x128xbf16> to vector<128x128xbf16>
    %cst_123 = arith.constant dense<0.000000e+00> : vector<128x128xf32>
    %230 = tpu.matmul %227, %229, %cst_123 {dimension_numbers = #tpu.dot_dimension_numbers<[1], [0], [0], [1], [0, 0, 1, 1], [], []>} : vector<128x128xbf16>, vector<128x128xbf16>, vector<128x128xf32> -> vector<128x128xf32>
    %c4_124 = arith.constant 4 : index
    %c0_125 = arith.constant 0 : index
    %c0_126 = arith.constant 0 : index
    %231 = vector.load %arg6[%c4_124, %c0_125, %c0_126] : memref<5x1x128xf32, #tpu.memory_space<vmem>>, vector<1x1x128xf32>
    %232 = vector.shape_cast %231 : vector<1x1x128xf32> to vector<1x128xf32>
    %233 = vector.broadcast %232 : vector<1x128xf32> to vector<128x128xf32>
    %234 = arith.addf %230, %233 : vector<128x128xf32>
    %cst_127 = arith.constant 0.000000e+00 : f32
    %235 = vector.broadcast %cst_127 : f32 to vector<128x128xf32>
    %236 = arith.maximumf %234, %235 : vector<128x128xf32>
    %c0_128 = arith.constant 0 : index
    %c0_129 = arith.constant 0 : index
    %237 = vector.load %arg7[%c0_128, %c0_129] : memref<16x128xbf16, #tpu.memory_space<vmem>>, vector<16x128xbf16>
    %238 = arith.truncf %236 : vector<128x128xf32> to vector<128x128xbf16>
    %cst_130 = arith.constant dense<0.000000e+00> : vector<16x128xf32>
    %239 = tpu.matmul %237, %238, %cst_130 {dimension_numbers = #tpu.dot_dimension_numbers<[1], [0], [0], [1], [0, 0, 1, 1], [], []>} : vector<16x128xbf16>, vector<128x128xbf16>, vector<16x128xf32> -> vector<16x128xf32>
    %c0_131 = arith.constant 0 : index
    %c0_132 = arith.constant 0 : index
    %240 = vector.load %arg8[%c0_131, %c0_132] : memref<16x1xf32, #tpu.memory_space<vmem>>, vector<16x1xf32>
    %241 = vector.broadcast %240 : vector<16x1xf32> to vector<16x128xf32>
    %242 = arith.mulf %239, %241 : vector<16x128xf32>
    %c0_133 = arith.constant 0 : index
    %c0_134 = arith.constant 0 : index
    %243 = vector.load %arg9[%c0_133, %c0_134] : memref<16x128xf32, #tpu.memory_space<vmem>>, vector<16x128xf32>
    tpu.vector_store %arg9[%c0_133, %c0_134], %242 {strides = array<i32>} : memref<16x128xf32, #tpu.memory_space<vmem>>, vector<16x128xf32>,
    return
  }
}

</mosaic_0001>

<llo_original>
// kernel: gin_forward.1
$region0: #{gin_forward.1}
  #allocation0 [shape = 'u32[]', space=smem, size = 0x4, offset = 0x4, fixed_abs, tag = 'smem constant byte address 0x4 - core index']
  #allocation1 [shape = 'u32[72,128]{1,0:T(1,128)}', space=vmem, size = 0x9000, scoped, tag = 'internal scratch']
  %s0 = inlined_call_operand.hbm [shape: bf16[128,128], index: 0, kind: input, shape index: {}]
  %s1 = inlined_call_operand.hbm [shape: f32[128,128], index: 1, kind: input, shape index: {}]
  %s2 = inlined_call_operand.hbm [shape: bf16[5,128,128], index: 2, kind: input, shape index: {}]
  %s3 = inlined_call_operand.vmem [shape: f32[5,1,128], index: 3, kind: input, shape index: {}]
  %s4 = inlined_call_operand.hbm [shape: f32[5,1,128], index: 4, kind: input, shape index: {}]
  %s5 = inlined_call_operand.hbm [shape: bf16[5,128,128], index: 5, kind: input, shape index: {}]
  %s6 = inlined_call_operand.hbm [shape: f32[5,1,128], index: 6, kind: input, shape index: {}]
  %s7 = inlined_call_operand.vmem [shape: bf16[16,128], index: 7, kind: input, shape index: {}]
  %s8 = inlined_call_operand.vmem [shape: f32[16,1], index: 8, kind: input, shape index: {}]
  %s9 = inlined_call_operand.vmem [shape: f32[16,128], index: 9, kind: output, shape index: {}]
  %s10 = sld [smem:[#allocation0]]
  $region70: #{gin_forward.1} parent=0
    _
  %s12 = ssub.s32 1, %s10
  %s13 = scalar_select 0, %s12, %s10
  $region1: #{gin_forward.1} parent=0
    #allocation2 [shape = 'u8[32768]{0}', space=vmem, size = 0x8000, scoped, tag = 'input window, operand 0, single buffered']
    #allocation3 [shape = 's32[1]{0}', space=sflag, size = 0x4, scoped, tag = 'scoped memory for gin_forward.1']
    #allocation4 [shape = 'u8[65536]{0}', space=vmem, size = 0x10000, scoped, tag = 'input window, operand 1, single buffered']
    #allocation5 [shape = 's32[1]{0}', space=sflag, size = 0x4, scoped, tag = 'scoped memory for gin_forward.1']
    #allocation6 [shape = 'u8[163840]{0}', space=vmem, size = 0x28000, scoped, tag = 'input window, operand 2, single buffered']
    #allocation7 [shape = 'u8[2560]{0}', space=vmem, size = 0xc00, scoped, tag = 'input window, operand 4, single buffered']
    #allocation8 [shape = 's32[1]{0}', space=sflag, size = 0x4, scoped, tag = 'scoped memory for gin_forward.1']
    #allocation9 [shape = 'u8[163840]{0}', space=vmem, size = 0x28000, scoped, tag = 'input window, operand 5, single buffered']
    #allocation10 [shape = 'u8[2560]{0}', space=vmem, size = 0xc00, scoped, tag = 'input window, operand 6, single buffered']
    #allocation11 [shape = 's32[1]{0}', space=sflag, size = 0x4, scoped, tag = 'scoped memory for gin_forward.1']
    %14 = vsyncpa [#allocation3], 0
    %15 = vsyncpa [#allocation5], 0
    %16 = vsyncpa [#allocation8], 0
    %17 = vsyncpa [#allocation11], 0
    // Predicated region
    $region2: #{gin_forward.1} parent=1 // pred_check
      _
    $region3: #{gin_forward.1} parent=1 // pred_check_branch
      %19 = sbr.rel (0) target = $region5
    $region4: #{gin_forward.1} parent=1 // pred_region
      %21 = vsyncadd [#allocation3], 0
      %s22 = sshll.u32 %s0, 4
      %s23 = int_to_ptr.hbm [resolvable:$true] %s22
      %s24 = sshll.u32 [#allocation2], 4
      %s25 = int_to_ptr.vmem [resolvable:$true] %s24
      %30 = dma.hbm_to_vmem [thread:$0]  %s23, 1024, %s25, [#allocation3], 64, 64, 4
    $region5: #{gin_forward.1} parent=1 // pred_fallthru
      _
    // Predicated region
    $region6: #{gin_forward.1} parent=1 // pred_check
      _
    $region7: #{gin_forward.1} parent=1 // pred_check_branch
      %32 = sbr.rel (0) target = $region9
    $region8: #{gin_forward.1} parent=1 // pred_region
      %34 = vsyncadd [#allocation5], 0
      %s35 = sshll.u32 %s1, 4
      %s36 = int_to_ptr.hbm [resolvable:$true] %s35
      %s37 = sshll.u32 [#allocation4], 4
      %s38 = int_to_ptr.vmem [resolvable:$true] %s37
      %43 = dma.hbm_to_vmem [thread:$0]  %s36, 2048, %s38, [#allocation5], 128, 128, 8
    $region9: #{gin_forward.1} parent=1 // pred_fallthru
      _
    // Predicated region
    $region10: #{gin_forward.1} parent=1 // pred_check
      _
    $region11: #{gin_forward.1} parent=1 // pred_check_branch
      %45 = sbr.rel (0) target = $region13
    $region12: #{gin_forward.1} parent=1 // pred_region
      %47 = vsyncadd [#allocation5], 0
      %s48 = sshll.u32 %s2, 4
      %s49 = int_to_ptr.hbm [resolvable:$true] %s48
      %s50 = sshll.u32 [#allocation6], 4
      %s51 = int_to_ptr.vmem [resolvable:$true] %s50
      %56 = dma.hbm_to_vmem [thread:$0]  %s49, 5120, %s51, [#allocation5], 64, 64, 4
    $region13: #{gin_forward.1} parent=1 // pred_fallthru
      _
    // Predicated region
    $region14: #{gin_forward.1} parent=1 // pred_check
      _
    $region15: #{gin_forward.1} parent=1 // pred_check_branch
      %58 = sbr.rel (0) target = $region17
    $region16: #{gin_forward.1} parent=1 // pred_region
      _
    $region17: #{gin_forward.1} parent=1 // pred_fallthru
      _
    // Predicated region
    $region18: #{gin_forward.1} parent=1 // pred_check
      _
    $region19: #{gin_forward.1} parent=1 // pred_check_branch
      %60 = sbr.rel (0) target = $region21
    $region20: #{gin_forward.1} parent=1 // pred_region
      %62 = vsyncadd [#allocation8], 0
      %s63 = sshll.u32 %s4, 4
      %s64 = int_to_ptr.hbm [resolvable:$true] %s63
      %s65 = sshll.u32 [#allocation7], 4
      %s66 = int_to_ptr.vmem [resolvable:$true] %s65
      %71 = dma.hbm_to_vmem [thread:$0]  %s64, 80, %s66, [#allocation8], 16, 16, 1
    $region21: #{gin_forward.1} parent=1 // pred_fallthru
      _
    // Predicated region
    $region22: #{gin_forward.1} parent=1 // pred_check
      _
    $region23: #{gin_forward.1} parent=1 // pred_check_branch
      %73 = sbr.rel (0) target = $region25
    $region24: #{gin_forward.1} parent=1 // pred_region
      %75 = vsyncadd [#allocation8], 0
      %s76 = sshll.u32 %s5, 4
      %s77 = int_to_ptr.hbm [resolvable:$true] %s76
      %s78 = sshll.u32 [#allocation9], 4
      %s79 = int_to_ptr.vmem [resolvable:$true] %s78
      %84 = dma.hbm_to_vmem [thread:$0]  %s77, 5120, %s79, [#allocation8], 64, 64, 4
    $region25: #{gin_forward.1} parent=1 // pred_fallthru
      _
    // Predicated region
    $region26: #{gin_forward.1} parent=1 // pred_check
      _
    $region27: #{gin_forward.1} parent=1 // pred_check_branch
      %86 = sbr.rel (0) target = $region29
    $region28: #{gin_forward.1} parent=1 // pred_region
      %88 = vsyncadd [#allocation11], 0
      %s89 = sshll.u32 %s6, 4
      %s90 = int_to_ptr.hbm [resolvable:$true] %s89
      %s91 = sshll.u32 [#allocation10], 4
      %s92 = int_to_ptr.vmem [resolvable:$true] %s91
      %97 = dma.hbm_to_vmem [thread:$0]  %s90, 80, %s92, [#allocation11], 16, 16, 1
    $region29: #{gin_forward.1} parent=1 // pred_fallthru
      _
    // Predicated region
    $region30: #{gin_forward.1} parent=1 // pred_check
      _
    $region31: #{gin_forward.1} parent=1 // pred_check_branch
      %99 = sbr.rel (0) target = $region33
    $region32: #{gin_forward.1} parent=1 // pred_region
      _
    $region33: #{gin_forward.1} parent=1 // pred_fallthru
      _
    // Predicated region
    $region34: #{gin_forward.1} parent=1 // pred_check
      _
    $region35: #{gin_forward.1} parent=1 // pred_check_branch
      %101 = sbr.rel (0) target = $region37
    $region36: #{gin_forward.1} parent=1 // pred_region
      _
    $region37: #{gin_forward.1} parent=1 // pred_fallthru
      _
    // Predicated region
    $region38: #{gin_forward.1} parent=1 // pred_check
      _
    $region39: #{gin_forward.1} parent=1 // pred_check_branch
      %103 = sbr.rel (0) target = $region41
    $region40: #{gin_forward.1} parent=1 // pred_region
      %105 = dma.done [#allocation3], 1024
    $region41: #{gin_forward.1} parent=1 // pred_fallthru
      _
    // Predicated region
    $region42: #{gin_forward.1} parent=1 // pred_check
      _
    $region43: #{gin_forward.1} parent=1 // pred_check_branch
      %107 = sbr.rel (0) target = $region45
    $region44: #{gin_forward.1} parent=1 // pred_region
      %109 = dma.done [#allocation5], 2048
    $region45: #{gin_forward.1} parent=1 // pred_fallthru
      _
    // Predicated region
    $region46: #{gin_forward.1} parent=1 // pred_check
      _
    $region47: #{gin_forward.1} parent=1 // pred_check_branch
      %111 = sbr.rel (0) target = $region49
    $region48: #{gin_forward.1} parent=1 // pred_region
      %113 = dma.done [#allocation5], 5120
    $region49: #{gin_forward.1} parent=1 // pred_fallthru
      _
    // Predicated region
    $region50: #{gin_forward.1} parent=1 // pred_check
      _
    $region51: #{gin_forward.1} parent=1 // pred_check_branch
      %115 = sbr.rel (0) target = $region53
    $region52: #{gin_forward.1} parent=1 // pred_region
      %117 = dma.done [#allocation8], 80
    $region53: #{gin_forward.1} parent=1 // pred_fallthru
      _
    // Predicated region
    $region54: #{gin_forward.1} parent=1 // pred_check
      _
    $region55: #{gin_forward.1} parent=1 // pred_check_branch
      %119 = sbr.rel (0) target = $region57
    $region56: #{gin_forward.1} parent=1 // pred_region
      %121 = dma.done [#allocation8], 5120
    $region57: #{gin_forward.1} parent=1 // pred_fallthru
      _
    // Predicated region
    $region58: #{gin_forward.1} parent=1 // pred_check
      _
    $region59: #{gin_forward.1} parent=1 // pred_check_branch
      %123 = sbr.rel (0) target = $region61
    $region60: #{gin_forward.1} parent=1 // pred_region
      %125 = dma.done [#allocation11], 80
    $region61: #{gin_forward.1} parent=1 // pred_fallthru
      _
    %v126 = vld [vmem:[#allocation2] sm:$0xf]
    %v127 = vld [vmem:[#allocation2 + $0x4] sm:$0xf]
    %v128 = vld [vmem:[#allocation2 + $0x8] sm:$0xf]
    %v129 = vld [vmem:[#allocation2 + $0xc] sm:$0xf]
    %v130 = vld [vmem:[#allocation2 + $0x10] sm:$0xf]
    %v131 = vld [vmem:[#allocation2 + $0x14] sm:$0xf]
    %v132 = vld [vmem:[#allocation2 + $0x18] sm:$0xf]
    %v133 = vld [vmem:[#allocation2 + $0x1c] sm:$0xf]
    %v134 = vld [vmem:[#allocation2 + $0x20] sm:$0xf]
    %v135 = vld [vmem:[#allocation2 + $0x24] sm:$0xf]
    %v136 = vld [vmem:[#allocation2 + $0x28] sm:$0xf]
    %v137 = vld [vmem:[#allocation2 + $0x2c] sm:$0xf]
    %v138 = vld [vmem:[#allocation2 + $0x30] sm:$0xf]
    %v139 = vld [vmem:[#allocation2 + $0x34] sm:$0xf]
    %v140 = vld [vmem:[#allocation2 + $0x38] sm:$0xf]
    %v141 = vld [vmem:[#allocation2 + $0x3c] sm:$0xf]
    %v142 = vld [vmem:[#allocation4] sm:$0xff]
    %v143 = vld [vmem:[#allocation4 + $0x8] sm:$0xff]
    %v144 = vld [vmem:[#allocation4 + $0x10] sm:$0xff]
    %v145 = vld [vmem:[#allocation4 + $0x18] sm:$0xff]
    %v146 = vld [vmem:[#allocation4 + $0x20] sm:$0xff]
    %v147 = vld [vmem:[#allocation4 + $0x28] sm:$0xff]
    %v148 = vld [vmem:[#allocation4 + $0x30] sm:$0xff]
    %v149 = vld [vmem:[#allocation4 + $0x38] sm:$0xff]
    %v150 = vld [vmem:[#allocation4 + $0x40] sm:$0xff]
    %v151 = vld [vmem:[#allocation4 + $0x48] sm:$0xff]
    %v152 = vld [vmem:[#allocation4 + $0x50] sm:$0xff]
    %v153 = vld [vmem:[#allocation4 + $0x58] sm:$0xff]
    %v154 = vld [vmem:[#allocation4 + $0x60] sm:$0xff]
    %v155 = vld [vmem:[#allocation4 + $0x68] sm:$0xff]
    %v156 = vld [vmem:[#allocation4 + $0x70] sm:$0xff]
    %v157 = vld [vmem:[#allocation4 + $0x78] sm:$0xff]
    %v158 = vpack.c.bf16 %v143, %v142
    %v159 = vpack.c.bf16 %v145, %v144
    %v160 = vpack.c.bf16 %v147, %v146
    %v161 = vpack.c.bf16 %v149, %v148
    %v162 = vpack.c.bf16 %v151, %v150
    %v163 = vpack.c.bf16 %v153, %v152
    %v164 = vpack.c.bf16 %v155, %v154
    %v165 = vpack.c.bf16 %v157, %v156
    %v182 = vunpack.c.l.b16 %v126
    %v183 = vunpack.c.l.b16 %v127
    %v184 = vunpack.c.l.b16 %v128
    %v185 = vunpack.c.l.b16 %v129
    %v186 = vunpack.c.l.b16 %v130
    %v187 = vunpack.c.l.b16 %v131
    %v188 = vunpack.c.l.b16 %v132
    %v189 = vunpack.c.l.b16 %v133
    %v190 = vunpack.c.l.b16 %v134
    %v191 = vunpack.c.l.b16 %v135
    %v192 = vunpack.c.l.b16 %v136
    %v193 = vunpack.c.l.b16 %v137
    %v194 = vunpack.c.l.b16 %v138
    %v195 = vunpack.c.l.b16 %v139
    %v196 = vunpack.c.l.b16 %v140
    %v197 = vunpack.c.l.b16 %v141
    %v198 = vpack.c.b16 %v183, %v182
    %v199 = vpack.c.b16 %v185, %v184
    %v200 = vpack.c.b16 %v187, %v186
    %v201 = vpack.c.b16 %v189, %v188
    %v202 = vpack.c.b16 %v191, %v190
    %v203 = vpack.c.b16 %v193, %v192
    %v204 = vpack.c.b16 %v195, %v194
    %v205 = vpack.c.b16 %v197, %v196
    %214 = vmatpush.bf16.msra.mxu0 %v165
    %215 = vmatpush.bf16.msra.mxu0 %v164
    %216 = vmatpush.bf16.msra.mxu0 %v163
    %217 = vmatpush.bf16.msra.mxu0 %v162
    %218 = vmatpush.bf16.msra.mxu0 %v161
    %219 = vmatpush.bf16.msra.mxu0 %v160
    %220 = vmatpush.bf16.msra.mxu0 %v159
    %221 = vmatpush.bf16.msra.mxu0 %v158
    %222 = vmatmul.bf16.gmra.mxu0 %v198
    %v223 = vpop.f32.mrf.mxu0
    %v224 = vadd.f32 0.0, %v223
    %v225 = vpop.f32.mrf.mxu0
    %v226 = vadd.f32 0.0, %v225
    %227 = vmatmul.bf16.gmra.mxu0 %v199
    %v228 = vpop.f32.mrf.mxu0
    %v229 = vadd.f32 0.0, %v228
    %v230 = vpop.f32.mrf.mxu0
    %v231 = vadd.f32 0.0, %v230
    %232 = vmatmul.bf16.gmra.mxu0 %v200
    %v233 = vpop.f32.mrf.mxu0
    %v234 = vadd.f32 0.0, %v233
    %v235 = vpop.f32.mrf.mxu0
    %v236 = vadd.f32 0.0, %v235
    %237 = vmatmul.bf16.gmra.mxu0 %v201
    %v238 = vpop.f32.mrf.mxu0
    %v239 = vadd.f32 0.0, %v238
    %v240 = vpop.f32.mrf.mxu0
    %v241 = vadd.f32 0.0, %v240
    %242 = vmatmul.bf16.gmra.mxu0 %v202
    %v243 = vpop.f32.mrf.mxu0
    %v244 = vadd.f32 0.0, %v243
    %v245 = vpop.f32.mrf.mxu0
    %v246 = vadd.f32 0.0, %v245
    %247 = vmatmul.bf16.gmra.mxu0 %v203
    %v248 = vpop.f32.mrf.mxu0
    %v249 = vadd.f32 0.0, %v248
    %v250 = vpop.f32.mrf.mxu0
    %v251 = vadd.f32 0.0, %v250
    %252 = vmatmul.bf16.gmra.mxu0 %v204
    %v253 = vpop.f32.mrf.mxu0
    %v254 = vadd.f32 0.0, %v253
    %v255 = vpop.f32.mrf.mxu0
    %v256 = vadd.f32 0.0, %v255
    %257 = vmatmul.bf16.gmra.mxu0 %v205
    %v258 = vpop.f32.mrf.mxu0
    %v259 = vadd.f32 0.0, %v258
    %v260 = vpop.f32.mrf.mxu0
    %v261 = vadd.f32 0.0, %v260
    %262 = vdwg.mxu0
    %v263 = vadd.f32 %v142, %v224
    %v264 = vadd.f32 %v143, %v226
    %v265 = vadd.f32 %v144, %v229
    %v266 = vadd.f32 %v145, %v231
    %v267 = vadd.f32 %v146, %v234
    %v268 = vadd.f32 %v147, %v236
    %v269 = vadd.f32 %v148, %v239
    %v270 = vadd.f32 %v149, %v241
    %v271 = vadd.f32 %v150, %v244
    %v272 = vadd.f32 %v151, %v246
    %v273 = vadd.f32 %v152, %v249
    %v274 = vadd.f32 %v153, %v251
    %v275 = vadd.f32 %v154, %v254
    %v276 = vadd.f32 %v155, %v256
    %v277 = vadd.f32 %v156, %v259
    %v278 = vadd.f32 %v157, %v261
    %v279 = vpack.c.bf16 %v264, %v263
    %v280 = vpack.c.bf16 %v266, %v265
    %v281 = vpack.c.bf16 %v268, %v267
    %v282 = vpack.c.bf16 %v270, %v269
    %v283 = vpack.c.bf16 %v272, %v271
    %v284 = vpack.c.bf16 %v274, %v273
    %v285 = vpack.c.bf16 %v276, %v275
    %v286 = vpack.c.bf16 %v278, %v277
    %v287 = vld [vmem:[#allocation6] sm:$0xf]
    %v288 = vld [vmem:[#allocation6 + $0x4] sm:$0xf]
    %v289 = vld [vmem:[#allocation6 + $0x8] sm:$0xf]
    %v290 = vld [vmem:[#allocation6 + $0xc] sm:$0xf]
    %v291 = vld [vmem:[#allocation6 + $0x10] sm:$0xf]
    %v292 = vld [vmem:[#allocation6 + $0x14] sm:$0xf]
    %v293 = vld [vmem:[#allocation6 + $0x18] sm:$0xf]
    %v294 = vld [vmem:[#allocation6 + $0x1c] sm:$0xf]
    %v295 = vld [vmem:[#allocation6 + $0x20] sm:$0xf]
    %v296 = vld [vmem:[#allocation6 + $0x24] sm:$0xf]
    %v297 = vld [vmem:[#allocation6 + $0x28] sm:$0xf]
    %v298 = vld [vmem:[#allocation6 + $0x2c] sm:$0xf]
    %v299 = vld [vmem:[#allocation6 + $0x30] sm:$0xf]
    %v300 = vld [vmem:[#allocation6 + $0x34] sm:$0xf]
    %v301 = vld [vmem:[#allocation6 + $0x38] sm:$0xf]
    %v302 = vld [vmem:[#allocation6 + $0x3c] sm:$0xf]
    %v319 = vunpack.c.l.b16 %v287
    %v320 = vunpack.c.l.b16 %v288
    %v321 = vunpack.c.l.b16 %v289
    %v322 = vunpack.c.l.b16 %v290
    %v323 = vunpack.c.l.b16 %v291
    %v324 = vunpack.c.l.b16 %v292
    %v325 = vunpack.c.l.b16 %v293
    %v326 = vunpack.c.l.b16 %v294
    %v327 = vunpack.c.l.b16 %v295
    %v328 = vunpack.c.l.b16 %v296
    %v329 = vunpack.c.l.b16 %v297
    %v330 = vunpack.c.l.b16 %v298
    %v331 = vunpack.c.l.b16 %v299
    %v332 = vunpack.c.l.b16 %v300
    %v333 = vunpack.c.l.b16 %v301
    %v334 = vunpack.c.l.b16 %v302
    %v335 = vpack.c.b16 %v320, %v319
    %v336 = vpack.c.b16 %v322, %v321
    %v337 = vpack.c.b16 %v324, %v323
    %v338 = vpack.c.b16 %v326, %v325
    %v339 = vpack.c.b16 %v328, %v327
    %v340 = vpack.c.b16 %v330, %v329
    %v341 = vpack.c.b16 %v332, %v331
    %v342 = vpack.c.b16 %v334, %v333
    %351 = vmatpush.bf16.msra.mxu0 %v342
    %352 = vmatpush.bf16.msra.mxu0 %v341
    %353 = vmatpush.bf16.msra.mxu0 %v340
    %354 = vmatpush.bf16.msra.mxu0 %v339
    %355 = vmatpush.bf16.msra.mxu0 %v338
    %356 = vmatpush.bf16.msra.mxu0 %v337
    %357 = vmatpush.bf16.msra.mxu0 %v336
    %358 = vmatpush.bf16.msra.mxu0 %v335
    %359 = vmatmul.bf16.gmra.mxu0 %v279
    %v360 = vpop.f32.mrf.mxu0
    %v361 = vadd.f32 0.0, %v360
    %v362 = vpop.f32.mrf.mxu0
    %v363 = vadd.f32 0.0, %v362
    %364 = vmatmul.bf16.gmra.mxu0 %v280
    %v365 = vpop.f32.mrf.mxu0
    %v366 = vadd.f32 0.0, %v365
    %v367 = vpop.f32.mrf.mxu0
    %v368 = vadd.f32 0.0, %v367
    %369 = vmatmul.bf16.gmra.mxu0 %v281
    %v370 = vpop.f32.mrf.mxu0
    %v371 = vadd.f32 0.0, %v370
    %v372 = vpop.f32.mrf.mxu0
    %v373 = vadd.f32 0.0, %v372
    %374 = vmatmul.bf16.gmra.mxu0 %v282
    %v375 = vpop.f32.mrf.mxu0
    %v376 = vadd.f32 0.0, %v375
    %v377 = vpop.f32.mrf.mxu0
    %v378 = vadd.f32 0.0, %v377
    %379 = vmatmul.bf16.gmra.mxu0 %v283
    %v380 = vpop.f32.mrf.mxu0
    %v381 = vadd.f32 0.0, %v380
    %v382 = vpop.f32.mrf.mxu0
    %v383 = vadd.f32 0.0, %v382
    %384 = vmatmul.bf16.gmra.mxu0 %v284
    %v385 = vpop.f32.mrf.mxu0
    %v386 = vadd.f32 0.0, %v385
    %v387 = vpop.f32.mrf.mxu0
    %v388 = vadd.f32 0.0, %v387
    %389 = vmatmul.bf16.gmra.mxu0 %v285
    %v390 = vpop.f32.mrf.mxu0
    %v391 = vadd.f32 0.0, %v390
    %v392 = vpop.f32.mrf.mxu0
    %v393 = vadd.f32 0.0, %v392
    %394 = vmatmul.bf16.gmra.mxu0 %v286
    %v395 = vpop.f32.mrf.mxu0
    %v396 = vadd.f32 0.0, %v395
    %v397 = vpop.f32.mrf.mxu0
    %v398 = vadd.f32 0.0, %v397
    %399 = vdwg.mxu0
    %v400 = vadd.f32 %v361, %v363
    %v401 = vadd.f32 %v400, %v366
    %v402 = vadd.f32 %v401, %v368
    %v403 = vadd.f32 %v402, %v371
    %v404 = vadd.f32 %v403, %v373
    %v405 = vadd.f32 %v404, %v376
    %v406 = vadd.f32 %v405, %v378
    %v407 = vadd.f32 %v406, %v381
    %v408 = vadd.f32 %v407, %v383
    %v409 = vadd.f32 %v408, %v386
    %v410 = vadd.f32 %v409, %v388
    %v411 = vadd.f32 %v410, %v391
    %v412 = vadd.f32 %v411, %v393
    %v413 = vadd.f32 %v412, %v396
    %v414 = vadd.f32 %v413, %v398
    %v415 = vrot.slane %v414, 4
    %v416 = vadd.f32 %v414, %v415
    %v417 = vrot.slane %v416, 2
    %v418 = vadd.f32 %v416, %v417
    %v419 = vrot.slane %v418, 1
    %v420 = vadd.f32 %v418, %v419
    %v421 = vmul.f32 %v361, %v361
    %v422 = vmul.f32 %v363, %v363
    %v423 = vmul.f32 %v366, %v366
    %v424 = vmul.f32 %v368, %v368
    %v425 = vmul.f32 %v371, %v371
    %v426 = vmul.f32 %v373, %v373
    %v427 = vmul.f32 %v376, %v376
    %v428 = vmul.f32 %v378, %v378
    %v429 = vmul.f32 %v381, %v381
    %v430 = vmul.f32 %v383, %v383
    %v431 = vmul.f32 %v386, %v386
    %v432 = vmul.f32 %v388, %v388
    %v433 = vmul.f32 %v391, %v391
    %v434 = vmul.f32 %v393, %v393
    %v435 = vmul.f32 %v396, %v396
    %v436 = vmul.f32 %v398, %v398
    %v437 = vadd.f32 %v421, %v422
    %v438 = vadd.f32 %v437, %v423
    %v439 = vadd.f32 %v438, %v424
    %v440 = vadd.f32 %v439, %v425
    %v441 = vadd.f32 %v440, %v426
    %v442 = vadd.f32 %v441, %v427
    %v443 = vadd.f32 %v442, %v428
    %v444 = vadd.f32 %v443, %v429
    %v445 = vadd.f32 %v444, %v430
    %v446 = vadd.f32 %v445, %v431
    %v447 = vadd.f32 %v446, %v432
    %v448 = vadd.f32 %v447, %v433
    %v449 = vadd.f32 %v448, %v434
    %v450 = vadd.f32 %v449, %v435
    %v451 = vadd.f32 %v450, %v436
    %v452 = vrot.slane %v451, 4
    %v453 = vadd.f32 %v451, %v452
    %v454 = vrot.slane %v453, 2
    %v455 = vadd.f32 %v453, %v454
    %v456 = vrot.slane %v455, 1
    %v457 = vadd.f32 %v455, %v456
    %v458 = vmul.f32 %v420, 0.0078125
    %v459 = vmul.f32 %v457, 0.0078125
    %v460 = vmul.f32 %v458, %v458
    %v461 = vsub.f32 %v459, %v460
    %v462 = vmax.f32 %v461, 0.0
    %v463 = vsub.f32 %v361, %v458
    %v464 = vsub.f32 %v363, %v458
    %v465 = vsub.f32 %v366, %v458
    %v466 = vsub.f32 %v368, %v458
    %v467 = vsub.f32 %v371, %v458
    %v468 = vsub.f32 %v373, %v458
    %v469 = vsub.f32 %v376, %v458
    %v470 = vsub.f32 %v378, %v458
    %v471 = vsub.f32 %v381, %v458
    %v472 = vsub.f32 %v383, %v458
    %v473 = vsub.f32 %v386, %v458
    %v474 = vsub.f32 %v388, %v458
    %v475 = vsub.f32 %v391, %v458
    %v476 = vsub.f32 %v393, %v458
    %v477 = vsub.f32 %v396, %v458
    %v478 = vsub.f32 %v398, %v458
    %v479 = vadd.f32 %v462, 1e-05
    %v480 = vrsqrt.pop %v479
    %v481 = vmul.f32 %v480, %v479
    %v482 = vmul.f32 %v481, %v480
    %v483 = vmul.f32 0.5, %v482
    %v484 = vsub.f32 1.5, %v483
    %v485 = vmul.f32 %v480, %v484
    %vm486 = vweird.f32 %v479
    %vm487 = vweird.f32 %v480
    %vm488 = vmor %vm486, %vm487
    %v489 = vsel %vm488, %v480, %v485
    %v490 = vmul.f32 %v463, %v489
    %v491 = vmul.f32 %v464, %v489
    %v492 = vmul.f32 %v465, %v489
    %v493 = vmul.f32 %v466, %v489
    %v494 = vmul.f32 %v467, %v489
    %v495 = vmul.f32 %v468, %v489
    %v496 = vmul.f32 %v469, %v489
    %v497 = vmul.f32 %v470, %v489
    %v498 = vmul.f32 %v471, %v489
    %v499 = vmul.f32 %v472, %v489
    %v500 = vmul.f32 %v473, %v489
    %v501 = vmul.f32 %v474, %v489
    %v502 = vmul.f32 %v475, %v489
    %v503 = vmul.f32 %v476, %v489
    %v504 = vmul.f32 %v477, %v489
    %v505 = vmul.f32 %v478, %v489
    %v506 = vld [vmem:[%s3] sm:$0x1]
    %v508 = vperm.slane %v506, 0
    %v510 = vmul.f32 %v490, %v508
    %v511 = vmul.f32 %v491, %v508
    %v512 = vmul.f32 %v492, %v508
    %v513 = vmul.f32 %v493, %v508
    %v514 = vmul.f32 %v494, %v508
    %v515 = vmul.f32 %v495, %v508
    %v516 = vmul.f32 %v496, %v508
    %v517 = vmul.f32 %v497, %v508
    %v518 = vmul.f32 %v498, %v508
    %v519 = vmul.f32 %v499, %v508
    %v520 = vmul.f32 %v500, %v508
    %v521 = vmul.f32 %v501, %v508
    %v522 = vmul.f32 %v502, %v508
    %v523 = vmul.f32 %v503, %v508
    %v524 = vmul.f32 %v504, %v508
    %v525 = vmul.f32 %v505, %v508
    %v526 = vld [vmem:[#allocation7] sm:$0x1]
    %v528 = vperm.slane %v526, 0
    %v530 = vadd.f32 %v510, %v528
    %v531 = vadd.f32 %v511, %v528
    %v532 = vadd.f32 %v512, %v528
    %v533 = vadd.f32 %v513, %v528
    %v534 = vadd.f32 %v514, %v528
    %v535 = vadd.f32 %v515, %v528
    %v536 = vadd.f32 %v516, %v528
    %v537 = vadd.f32 %v517, %v528
    %v538 = vadd.f32 %v518, %v528
    %v539 = vadd.f32 %v519, %v528
    %v540 = vadd.f32 %v520, %v528
    %v541 = vadd.f32 %v521, %v528
    %v542 = vadd.f32 %v522, %v528
    %v543 = vadd.f32 %v523, %v528
    %v544 = vadd.f32 %v524, %v528
    %v545 = vadd.f32 %v525, %v528
    %v546 = vmax.f32 %v530, 0.0
    %v547 = vmax.f32 %v531, 0.0
    %v548 = vmax.f32 %v532, 0.0
    %v549 = vmax.f32 %v533, 0.0
    %v550 = vmax.f32 %v534, 0.0
    %v551 = vmax.f32 %v535, 0.0
    %v552 = vmax.f32 %v536, 0.0
    %v553 = vmax.f32 %v537, 0.0
    %v554 = vmax.f32 %v538, 0.0
    %v555 = vmax.f32 %v539, 0.0
    %v556 = vmax.f32 %v540, 0.0
    %v557 = vmax.f32 %v541, 0.0
    %v558 = vmax.f32 %v542, 0.0
    %v559 = vmax.f32 %v543, 0.0
    %v560 = vmax.f32 %v544, 0.0
    %v561 = vmax.f32 %v545, 0.0
    %v562 = vpack.c.bf16 %v547, %v546
    %v563 = vpack.c.bf16 %v549, %v548
    %v564 = vpack.c.bf16 %v551, %v550
    %v565 = vpack.c.bf16 %v553, %v552
    %v566 = vpack.c.bf16 %v555, %v554
    %v567 = vpack.c.bf16 %v557, %v556
    %v568 = vpack.c.bf16 %v559, %v558
    %v569 = vpack.c.bf16 %v561, %v560
    %v570 = vld [vmem:[#allocation9] sm:$0xf]
    %v571 = vld [vmem:[#allocation9 + $0x4] sm:$0xf]
    %v572 = vld [vmem:[#allocation9 + $0x8] sm:$0xf]
    %v573 = vld [vmem:[#allocation9 + $0xc] sm:$0xf]
    %v574 = vld [vmem:[#allocation9 + $0x10] sm:$0xf]
    %v575 = vld [vmem:[#allocation9 + $0x14] sm:$0xf]
    %v576 = vld [vmem:[#allocation9 + $0x18] sm:$0xf]
    %v577 = vld [vmem:[#allocation9 + $0x1c] sm:$0xf]
    %v578 = vld [vmem:[#allocation9 + $0x20] sm:$0xf]
    %v579 = vld [vmem:[#allocation9 + $0x24] sm:$0xf]
    %v580 = vld [vmem:[#allocation9 + $0x28] sm:$0xf]
    %v581 = vld [vmem:[#allocation9 + $0x2c] sm:$0xf]
    %v582 = vld [vmem:[#allocation9 + $0x30] sm:$0xf]
    %v583 = vld [vmem:[#allocation9 + $0x34] sm:$0xf]
    %v584 = vld [vmem:[#allocation9 + $0x38] sm:$0xf]
    %v585 = vld [vmem:[#allocation9 + $0x3c] sm:$0xf]
    %v586 = vld [vmem:[#allocation10] sm:$0x1]
    %v588 = vperm.slane %v586, 0
    %v606 = vunpack.c.l.b16 %v570
    %v607 = vunpack.c.l.b16 %v571
    %v608 = vunpack.c.l.b16 %v572
    %v609 = vunpack.c.l.b16 %v573
    %v610 = vunpack.c.l.b16 %v574
    %v611 = vunpack.c.l.b16 %v575
    %v612 = vunpack.c.l.b16 %v576
    %v613 = vunpack.c.l.b16 %v577
    %v614 = vunpack.c.l.b16 %v578
    %v615 = vunpack.c.l.b16 %v579
    %v616 = vunpack.c.l.b16 %v580
    %v617 = vunpack.c.l.b16 %v581
    %v618 = vunpack.c.l.b16 %v582
    %v619 = vunpack.c.l.b16 %v583
    %v620 = vunpack.c.l.b16 %v584
    %v621 = vunpack.c.l.b16 %v585
    %v622 = vpack.c.b16 %v607, %v606
    %v623 = vpack.c.b16 %v609, %v608
    %v624 = vpack.c.b16 %v611, %v610
    %v625 = vpack.c.b16 %v613, %v612
    %v626 = vpack.c.b16 %v615, %v614
    %v627 = vpack.c.b16 %v617, %v616
    %v628 = vpack.c.b16 %v619, %v618
    %v629 = vpack.c.b16 %v621, %v620
    %638 = vmatpush.bf16.msra.mxu0 %v629
    %639 = vmatpush.bf16.msra.mxu0 %v628
    %640 = vmatpush.bf16.msra.mxu0 %v627
    %641 = vmatpush.bf16.msra.mxu0 %v626
    %642 = vmatpush.bf16.msra.mxu0 %v625
    %643 = vmatpush.bf16.msra.mxu0 %v624
    %644 = vmatpush.bf16.msra.mxu0 %v623
    %645 = vmatpush.bf16.msra.mxu0 %v622
    %646 = vmatmul.bf16.gmra.mxu0 %v562
    %v647 = vpop.f32.mrf.mxu0
    %v648 = vadd.f32 %v588, %v647
    %v649 = vpop.f32.mrf.mxu0
    %v650 = vadd.f32 %v588, %v649
    %651 = vmatmul.bf16.gmra.mxu0 %v563
    %v652 = vpop.f32.mrf.mxu0
    %v653 = vadd.f32 %v588, %v652
    %v654 = vpop.f32.mrf.mxu0
    %v655 = vadd.f32 %v588, %v654
    %656 = vmatmul.bf16.gmra.mxu0 %v564
    %v657 = vpop.f32.mrf.mxu0
    %v658 = vadd.f32 %v588, %v657
    %v659 = vpop.f32.mrf.mxu0
    %v660 = vadd.f32 %v588, %v659
    %661 = vmatmul.bf16.gmra.mxu0 %v565
    %v662 = vpop.f32.mrf.mxu0
    %v663 = vadd.f32 %v588, %v662
    %v664 = vpop.f32.mrf.mxu0
    %v665 = vadd.f32 %v588, %v664
    %666 = vmatmul.bf16.gmra.mxu0 %v566
    %v667 = vpop.f32.mrf.mxu0
    %v668 = vadd.f32 %v588, %v667
    %v669 = vpop.f32.mrf.mxu0
    %v670 = vadd.f32 %v588, %v669
    %671 = vmatmul.bf16.gmra.mxu0 %v567
    %v672 = vpop.f32.mrf.mxu0
    %v673 = vadd.f32 %v588, %v672
    %v674 = vpop.f32.mrf.mxu0
    %v675 = vadd.f32 %v588, %v674
    %676 = vmatmul.bf16.gmra.mxu0 %v568
    %v677 = vpop.f32.mrf.mxu0
    %v678 = vadd.f32 %v588, %v677
    %v679 = vpop.f32.mrf.mxu0
    %v680 = vadd.f32 %v588, %v679
    %681 = vmatmul.bf16.gmra.mxu0 %v569
    %v682 = vpop.f32.mrf.mxu0
    %v683 = vadd.f32 %v588, %v682
    %v684 = vpop.f32.mrf.mxu0
    %v685 = vadd.f32 %v588, %v684
    %686 = vdwg.mxu0
    %v687 = vmax.f32 %v648, 0.0
    %v688 = vmax.f32 %v650, 0.0
    %v689 = vmax.f32 %v653, 0.0
    %v690 = vmax.f32 %v655, 0.0
    %v691 = vmax.f32 %v658, 0.0
    %v692 = vmax.f32 %v660, 0.0
    %v693 = vmax.f32 %v663, 0.0
    %v694 = vmax.f32 %v665, 0.0
    %v695 = vmax.f32 %v668, 0.0
    %v696 = vmax.f32 %v670, 0.0
    %v697 = vmax.f32 %v673, 0.0
    %v698 = vmax.f32 %v675, 0.0
    %v699 = vmax.f32 %v678, 0.0
    %v700 = vmax.f32 %v680, 0.0
    %v701 = vmax.f32 %v683, 0.0
    %v702 = vmax.f32 %v685, 0.0
    %v703 = vpack.c.bf16 %v688, %v687
    %v704 = vpack.c.bf16 %v690, %v689
    %v705 = vpack.c.bf16 %v692, %v691
    %v706 = vpack.c.bf16 %v694, %v693
    %v707 = vpack.c.bf16 %v696, %v695
    %v708 = vpack.c.bf16 %v698, %v697
    %v709 = vpack.c.bf16 %v700, %v699
    %v710 = vpack.c.bf16 %v702, %v701
    %711 = vmatpush.bf16.msra.mxu0 %v710
    %712 = vmatpush.bf16.msra.mxu0 %v709
    %713 = vmatpush.bf16.msra.mxu0 %v708
    %714 = vmatpush.bf16.msra.mxu0 %v707
    %715 = vmatpush.bf16.msra.mxu0 %v706
    %716 = vmatpush.bf16.msra.mxu0 %v705
    %717 = vmatpush.bf16.msra.mxu0 %v704
    %718 = vmatpush.bf16.msra.mxu0 %v703
    %719 = vmatmul.bf16.gmra.mxu0 %v198
    %v720 = vpop.f32.mrf.mxu0
    %v721 = vadd.f32 0.0, %v720
    %v722 = vpop.f32.mrf.mxu0
    %v723 = vadd.f32 0.0, %v722
    %724 = vmatmul.bf16.gmra.mxu0 %v199
    %v725 = vpop.f32.mrf.mxu0
    %v726 = vadd.f32 0.0, %v725
    %v727 = vpop.f32.mrf.mxu0
    %v728 = vadd.f32 0.0, %v727
    %729 = vmatmul.bf16.gmra.mxu0 %v200
    %v730 = vpop.f32.mrf.mxu0
    %v731 = vadd.f32 0.0, %v730
    %v732 = vpop.f32.mrf.mxu0
    %v733 = vadd.f32 0.0, %v732
    %734 = vmatmul.bf16.gmra.mxu0 %v201
    %v735 = vpop.f32.mrf.mxu0
    %v736 = vadd.f32 0.0, %v735
    %v737 = vpop.f32.mrf.mxu0
    %v738 = vadd.f32 0.0, %v737
    %739 = vmatmul.bf16.gmra.mxu0 %v202
    %v740 = vpop.f32.mrf.mxu0
    %v741 = vadd.f32 0.0, %v740
    %v742 = vpop.f32.mrf.mxu0
    %v743 = vadd.f32 0.0, %v742
    %744 = vmatmul.bf16.gmra.mxu0 %v203
    %v745 = vpop.f32.mrf.mxu0
    %v746 = vadd.f32 0.0, %v745
    %v747 = vpop.f32.mrf.mxu0
    %v748 = vadd.f32 0.0, %v747
    %749 = vmatmul.bf16.gmra.mxu0 %v204
    %v750 = vpop.f32.mrf.mxu0
    %v751 = vadd.f32 0.0, %v750
    %v752 = vpop.f32.mrf.mxu0
    %v753 = vadd.f32 0.0, %v752
    %754 = vmatmul.bf16.gmra.mxu0 %v205
    %v755 = vpop.f32.mrf.mxu0
    %v756 = vadd.f32 0.0, %v755
    %v757 = vpop.f32.mrf.mxu0
    %v758 = vadd.f32 0.0, %v757
    %759 = vdwg.mxu0
    %v760 = vadd.f32 %v687, %v721
    %v761 = vadd.f32 %v688, %v723
    %v762 = vadd.f32 %v689, %v726
    %v763 = vadd.f32 %v690, %v728
    %v764 = vadd.f32 %v691, %v731
    %v765 = vadd.f32 %v692, %v733
    %v766 = vadd.f32 %v693, %v736
    %v767 = vadd.f32 %v694, %v738
    %v768 = vadd.f32 %v695, %v741
    %v769 = vadd.f32 %v696, %v743
    %v770 = vadd.f32 %v697, %v746
    %v771 = vadd.f32 %v698, %v748
    %v772 = vadd.f32 %v699, %v751
    %v773 = vadd.f32 %v700, %v753
    %v774 = vadd.f32 %v701, %v756
    %v775 = vadd.f32 %v702, %v758
    %v776 = vpack.c.bf16 %v761, %v760
    %v777 = vpack.c.bf16 %v763, %v762
    %v778 = vpack.c.bf16 %v765, %v764
    %v779 = vpack.c.bf16 %v767, %v766
    %v780 = vpack.c.bf16 %v769, %v768
    %v781 = vpack.c.bf16 %v771, %v770
    %v782 = vpack.c.bf16 %v773, %v772
    %v783 = vpack.c.bf16 %v775, %v774
    %s784 = scalar_lea.vmem [#allocation6], 64
    %v785 = vld [vmem:[%s784] sm:$0xf]
    %v786 = vld [vmem:[%s784 + $0x4] sm:$0xf]
    %v787 = vld [vmem:[%s784 + $0x8] sm:$0xf]
    %v788 = vld [vmem:[%s784 + $0xc] sm:$0xf]
    %v789 = vld [vmem:[%s784 + $0x10] sm:$0xf]
    %v790 = vld [vmem:[%s784 + $0x14] sm:$0xf]
    %v791 = vld [vmem:[%s784 + $0x18] sm:$0xf]
    %v792 = vld [vmem:[%s784 + $0x1c] sm:$0xf]
    %v793 = vld [vmem:[%s784 + $0x20] sm:$0xf]
    %v794 = vld [vmem:[%s784 + $0x24] sm:$0xf]
    %v795 = vld [vmem:[%s784 + $0x28] sm:$0xf]
    %v796 = vld [vmem:[%s784 + $0x2c] sm:$0xf]
    %v797 = vld [vmem:[%s784 + $0x30] sm:$0xf]
    %v798 = vld [vmem:[%s784 + $0x34] sm:$0xf]
    %v799 = vld [vmem:[%s784 + $0x38] sm:$0xf]
    %v800 = vld [vmem:[%s784 + $0x3c] sm:$0xf]
    %v817 = vunpack.c.l.b16 %v785
    %v818 = vunpack.c.l.b16 %v786
    %v819 = vunpack.c.l.b16 %v787
    %v820 = vunpack.c.l.b16 %v788
    %v821 = vunpack.c.l.b16 %v789
    %v822 = vunpack.c.l.b16 %v790
    %v823 = vunpack.c.l.b16 %v791
    %v824 = vunpack.c.l.b16 %v792
    %v825 = vunpack.c.l.b16 %v793
    %v826 = vunpack.c.l.b16 %v794
    %v827 = vunpack.c.l.b16 %v795
    %v828 = vunpack.c.l.b16 %v796
    %v829 = vunpack.c.l.b16 %v797
    %v830 = vunpack.c.l.b16 %v798
    %v831 = vunpack.c.l.b16 %v799
    %v832 = vunpack.c.l.b16 %v800
    %v833 = vpack.c.b16 %v818, %v817
    %v834 = vpack.c.b16 %v820, %v819
    %v835 = vpack.c.b16 %v822, %v821
    %v836 = vpack.c.b16 %v824, %v823
    %v837 = vpack.c.b16 %v826, %v825
    %v838 = vpack.c.b16 %v828, %v827
    %v839 = vpack.c.b16 %v830, %v829
    %v840 = vpack.c.b16 %v832, %v831
    %849 = vmatpush.bf16.msra.mxu0 %v840
    %850 = vmatpush.bf16.msra.mxu0 %v839
    %851 = vmatpush.bf16.msra.mxu0 %v838
    %852 = vmatpush.bf16.msra.mxu0 %v837
    %853 = vmatpush.bf16.msra.mxu0 %v836
    %854 = vmatpush.bf16.msra.mxu0 %v835
    %855 = vmatpush.bf16.msra.mxu0 %v834
    %856 = vmatpush.bf16.msra.mxu0 %v833
    %857 = vmatmul.bf16.gmra.mxu0 %v776
    %v858 = vpop.f32.mrf.mxu0
    %v859 = vadd.f32 0.0, %v858
    %v860 = vpop.f32.mrf.mxu0
    %v861 = vadd.f32 0.0, %v860
    %862 = vmatmul.bf16.gmra.mxu0 %v777
    %v863 = vpop.f32.mrf.mxu0
    %v864 = vadd.f32 0.0, %v863
    %v865 = vpop.f32.mrf.mxu0
    %v866 = vadd.f32 0.0, %v865
    %867 = vmatmul.bf16.gmra.mxu0 %v778
    %v868 = vpop.f32.mrf.mxu0
    %v869 = vadd.f32 0.0, %v868
    %v870 = vpop.f32.mrf.mxu0
    %v871 = vadd.f32 0.0, %v870
    %872 = vmatmul.bf16.gmra.mxu0 %v779
    %v873 = vpop.f32.mrf.mxu0
    %v874 = vadd.f32 0.0, %v873
    %v875 = vpop.f32.mrf.mxu0
    %v876 = vadd.f32 0.0, %v875
    %877 = vmatmul.bf16.gmra.mxu0 %v780
    %v878 = vpop.f32.mrf.mxu0
    %v879 = vadd.f32 0.0, %v878
    %v880 = vpop.f32.mrf.mxu0
    %v881 = vadd.f32 0.0, %v880
    %882 = vmatmul.bf16.gmra.mxu0 %v781
    %v883 = vpop.f32.mrf.mxu0
    %v884 = vadd.f32 0.0, %v883
    %v885 = vpop.f32.mrf.mxu0
    %v886 = vadd.f32 0.0, %v885
    %887 = vmatmul.bf16.gmra.mxu0 %v782
    %v888 = vpop.f32.mrf.mxu0
    %v889 = vadd.f32 0.0, %v888
    %v890 = vpop.f32.mrf.mxu0
    %v891 = vadd.f32 0.0, %v890
    %892 = vmatmul.bf16.gmra.mxu0 %v783
    %v893 = vpop.f32.mrf.mxu0
    %v894 = vadd.f32 0.0, %v893
    %v895 = vpop.f32.mrf.mxu0
    %v896 = vadd.f32 0.0, %v895
    %897 = vdwg.mxu0
    %v898 = vadd.f32 %v859, %v861
    %v899 = vadd.f32 %v898, %v864
    %v900 = vadd.f32 %v899, %v866
    %v901 = vadd.f32 %v900, %v869
    %v902 = vadd.f32 %v901, %v871
    %v903 = vadd.f32 %v902, %v874
    %v904 = vadd.f32 %v903, %v876
    %v905 = vadd.f32 %v904, %v879
    %v906 = vadd.f32 %v905, %v881
    %v907 = vadd.f32 %v906, %v884
    %v908 = vadd.f32 %v907, %v886
    %v909 = vadd.f32 %v908, %v889
    %v910 = vadd.f32 %v909, %v891
    %v911 = vadd.f32 %v910, %v894
    %v912 = vadd.f32 %v911, %v896
    %v913 = vrot.slane %v912, 4
    %v914 = vadd.f32 %v912, %v913
    %v915 = vrot.slane %v914, 2
    %v916 = vadd.f32 %v914, %v915
    %v917 = vrot.slane %v916, 1
    %v918 = vadd.f32 %v916, %v917
    %v919 = vmul.f32 %v859, %v859
    %v920 = vmul.f32 %v861, %v861
    %v921 = vmul.f32 %v864, %v864
    %v922 = vmul.f32 %v866, %v866
    %v923 = vmul.f32 %v869, %v869
    %v924 = vmul.f32 %v871, %v871
    %v925 = vmul.f32 %v874, %v874
    %v926 = vmul.f32 %v876, %v876
    %v927 = vmul.f32 %v879, %v879
    %v928 = vmul.f32 %v881, %v881
    %v929 = vmul.f32 %v884, %v884
    %v930 = vmul.f32 %v886, %v886
    %v931 = vmul.f32 %v889, %v889
    %v932 = vmul.f32 %v891, %v891
    %v933 = vmul.f32 %v894, %v894
    %v934 = vmul.f32 %v896, %v896
    %v935 = vadd.f32 %v919, %v920
    %v936 = vadd.f32 %v935, %v921
    %v937 = vadd.f32 %v936, %v922
    %v938 = vadd.f32 %v937, %v923
    %v939 = vadd.f32 %v938, %v924
    %v940 = vadd.f32 %v939, %v925
    %v941 = vadd.f32 %v940, %v926
    %v942 = vadd.f32 %v941, %v927
    %v943 = vadd.f32 %v942, %v928
    %v944 = vadd.f32 %v943, %v929
    %v945 = vadd.f32 %v944, %v930
    %v946 = vadd.f32 %v945, %v931
    %v947 = vadd.f32 %v946, %v932
    %v948 = vadd.f32 %v947, %v933
    %v949 = vadd.f32 %v948, %v934
    %v950 = vrot.slane %v949, 4
    %v951 = vadd.f32 %v949, %v950
    %v952 = vrot.slane %v951, 2
    %v953 = vadd.f32 %v951, %v952
    %v954 = vrot.slane %v953, 1
    %v955 = vadd.f32 %v953, %v954
    %v956 = vmul.f32 %v918, 0.0078125
    %v957 = vmul.f32 %v955, 0.0078125
    %v958 = vmul.f32 %v956, %v956
    %v959 = vsub.f32 %v957, %v958
    %v960 = vmax.f32 %v959, 0.0
    %v961 = vsub.f32 %v859, %v956
    %v962 = vsub.f32 %v861, %v956
    %v963 = vsub.f32 %v864, %v956
    %v964 = vsub.f32 %v866, %v956
    %v965 = vsub.f32 %v869, %v956
    %v966 = vsub.f32 %v871, %v956
    %v967 = vsub.f32 %v874, %v956
    %v968 = vsub.f32 %v876, %v956
    %v969 = vsub.f32 %v879, %v956
    %v970 = vsub.f32 %v881, %v956
    %v971 = vsub.f32 %v884, %v956
    %v972 = vsub.f32 %v886, %v956
    %v973 = vsub.f32 %v889, %v956
    %v974 = vsub.f32 %v891, %v956
    %v975 = vsub.f32 %v894, %v956
    %v976 = vsub.f32 %v896, %v956
    %v977 = vadd.f32 %v960, 1e-05
    %v978 = vrsqrt.pop %v977
    %v979 = vmul.f32 %v978, %v977
    %v980 = vmul.f32 %v979, %v978
    %v981 = vmul.f32 0.5, %v980
    %v982 = vsub.f32 1.5, %v981
    %v983 = vmul.f32 %v978, %v982
    %vm984 = vweird.f32 %v977
    %vm985 = vweird.f32 %v978
    %vm986 = vmor %vm984, %vm985
    %v987 = vsel %vm986, %v978, %v983
    %v988 = vmul.f32 %v961, %v987
    %v989 = vmul.f32 %v962, %v987
    %v990 = vmul.f32 %v963, %v987
    %v991 = vmul.f32 %v964, %v987
    %v992 = vmul.f32 %v965, %v987
    %v993 = vmul.f32 %v966, %v987
    %v994 = vmul.f32 %v967, %v987
    %v995 = vmul.f32 %v968, %v987
    %v996 = vmul.f32 %v969, %v987
    %v997 = vmul.f32 %v970, %v987
    %v998 = vmul.f32 %v971, %v987
    %v999 = vmul.f32 %v972, %v987
    %v1000 = vmul.f32 %v973, %v987
    %v1001 = vmul.f32 %v974, %v987
    %v1002 = vmul.f32 %v975, %v987
    %v1003 = vmul.f32 %v976, %v987
    %s1004 = scalar_lea.vmem %s3, 1
    %v1005 = vld [vmem:[%s1004] sm:$0x1]
    %v1007 = vperm.slane %v1005, 0
    %v1009 = vmul.f32 %v988, %v1007
    %v1010 = vmul.f32 %v989, %v1007
    %v1011 = vmul.f32 %v990, %v1007
    %v1012 = vmul.f32 %v991, %v1007
    %v1013 = vmul.f32 %v992, %v1007
    %v1014 = vmul.f32 %v993, %v1007
    %v1015 = vmul.f32 %v994, %v1007
    %v1016 = vmul.f32 %v995, %v1007
    %v1017 = vmul.f32 %v996, %v1007
    %v1018 = vmul.f32 %v997, %v1007
    %v1019 = vmul.f32 %v998, %v1007
    %v1020 = vmul.f32 %v999, %v1007
    %v1021 = vmul.f32 %v1000, %v1007
    %v1022 = vmul.f32 %v1001, %v1007
    %v1023 = vmul.f32 %v1002, %v1007
    %v1024 = vmul.f32 %v1003, %v1007
    %s1025 = scalar_lea.vmem [#allocation7], 1
    %v1026 = vld [vmem:[%s1025] sm:$0x1]
    %v1028 = vperm.slane %v1026, 0
    %v1030 = vadd.f32 %v1009, %v1028
    %v1031 = vadd.f32 %v1010, %v1028
    %v1032 = vadd.f32 %v1011, %v1028
    %v1033 = vadd.f32 %v1012, %v1028
    %v1034 = vadd.f32 %v1013, %v1028
    %v1035 = vadd.f32 %v1014, %v1028
    %v1036 = vadd.f32 %v1015, %v1028
    %v1037 = vadd.f32 %v1016, %v1028
    %v1038 = vadd.f32 %v1017, %v1028
    %v1039 = vadd.f32 %v1018, %v1028
    %v1040 = vadd.f32 %v1019, %v1028
    %v1041 = vadd.f32 %v1020, %v1028
    %v1042 = vadd.f32 %v1021, %v1028
    %v1043 = vadd.f32 %v1022, %v1028
    %v1044 = vadd.f32 %v1023, %v1028
    %v1045 = vadd.f32 %v1024, %v1028
    %v1046 = vmax.f32 %v1030, 0.0
    %v1047 = vmax.f32 %v1031, 0.0
    %v1048 = vmax.f32 %v1032, 0.0
    %v1049 = vmax.f32 %v1033, 0.0
    %v1050 = vmax.f32 %v1034, 0.0
    %v1051 = vmax.f32 %v1035, 0.0
    %v1052 = vmax.f32 %v1036, 0.0
    %v1053 = vmax.f32 %v1037, 0.0
    %v1054 = vmax.f32 %v1038, 0.0
    %v1055 = vmax.f32 %v1039, 0.0
    %v1056 = vmax.f32 %v1040, 0.0
    %v1057 = vmax.f32 %v1041, 0.0
    %v1058 = vmax.f32 %v1042, 0.0
    %v1059 = vmax.f32 %v1043, 0.0
    %v1060 = vmax.f32 %v1044, 0.0
    %v1061 = vmax.f32 %v1045, 0.0
    %v1062 = vpack.c.bf16 %v1047, %v1046
    %v1063 = vpack.c.bf16 %v1049, %v1048
    %v1064 = vpack.c.bf16 %v1051, %v1050
    %v1065 = vpack.c.bf16 %v1053, %v1052
    %v1066 = vpack.c.bf16 %v1055, %v1054
    %v1067 = vpack.c.bf16 %v1057, %v1056
    %v1068 = vpack.c.bf16 %v1059, %v1058
    %v1069 = vpack.c.bf16 %v1061, %v1060
    %s1070 = scalar_lea.vmem [#allocation9], 64
    %v1071 = vld [vmem:[%s1070] sm:$0xf]
    %v1072 = vld [vmem:[%s1070 + $0x4] sm:$0xf]
    %v1073 = vld [vmem:[%s1070 + $0x8] sm:$0xf]
    %v1074 = vld [vmem:[%s1070 + $0xc] sm:$0xf]
    %v1075 = vld [vmem:[%s1070 + $0x10] sm:$0xf]
    %v1076 = vld [vmem:[%s1070 + $0x14] sm:$0xf]
    %v1077 = vld [vmem:[%s1070 + $0x18] sm:$0xf]
    %v1078 = vld [vmem:[%s1070 + $0x1c] sm:$0xf]
    %v1079 = vld [vmem:[%s1070 + $0x20] sm:$0xf]
    %v1080 = vld [vmem:[%s1070 + $0x24] sm:$0xf]
    %v1081 = vld [vmem:[%s1070 + $0x28] sm:$0xf]
    %v1082 = vld [vmem:[%s1070 + $0x2c] sm:$0xf]
    %v1083 = vld [vmem:[%s1070 + $0x30] sm:$0xf]
    %v1084 = vld [vmem:[%s1070 + $0x34] sm:$0xf]
    %v1085 = vld [vmem:[%s1070 + $0x38] sm:$0xf]
    %v1086 = vld [vmem:[%s1070 + $0x3c] sm:$0xf]
    %s1087 = scalar_lea.vmem [#allocation10], 1
    %v1088 = vld [vmem:[%s1087] sm:$0x1]
    %v1090 = vperm.slane %v1088, 0
    %v1108 = vunpack.c.l.b16 %v1071
    %v1109 = vunpack.c.l.b16 %v1072
    %v1110 = vunpack.c.l.b16 %v1073
    %v1111 = vunpack.c.l.b16 %v1074
    %v1112 = vunpack.c.l.b16 %v1075
    %v1113 = vunpack.c.l.b16 %v1076
    %v1114 = vunpack.c.l.b16 %v1077
    %v1115 = vunpack.c.l.b16 %v1078
    %v1116 = vunpack.c.l.b16 %v1079
    %v1117 = vunpack.c.l.b16 %v1080
    %v1118 = vunpack.c.l.b16 %v1081
    %v1119 = vunpack.c.l.b16 %v1082
    %v1120 = vunpack.c.l.b16 %v1083
    %v1121 = vunpack.c.l.b16 %v1084
    %v1122 = vunpack.c.l.b16 %v1085
    %v1123 = vunpack.c.l.b16 %v1086
    %v1124 = vpack.c.b16 %v1109, %v1108
    %v1125 = vpack.c.b16 %v1111, %v1110
    %v1126 = vpack.c.b16 %v1113, %v1112
    %v1127 = vpack.c.b16 %v1115, %v1114
    %v1128 = vpack.c.b16 %v1117, %v1116
    %v1129 = vpack.c.b16 %v1119, %v1118
    %v1130 = vpack.c.b16 %v1121, %v1120
    %v1131 = vpack.c.b16 %v1123, %v1122
    %1140 = vmatpush.bf16.msra.mxu0 %v1131
    %1141 = vmatpush.bf16.msra.mxu0 %v1130
    %1142 = vmatpush.bf16.msra.mxu0 %v1129
    %1143 = vmatpush.bf16.msra.mxu0 %v1128
    %1144 = vmatpush.bf16.msra.mxu0 %v1127
    %1145 = vmatpush.bf16.msra.mxu0 %v1126
    %1146 = vmatpush.bf16.msra.mxu0 %v1125
    %1147 = vmatpush.bf16.msra.mxu0 %v1124
    %1148 = vmatmul.bf16.gmra.mxu0 %v1062
    %v1149 = vpop.f32.mrf.mxu0
    %v1150 = vadd.f32 %v1090, %v1149
    %v1151 = vpop.f32.mrf.mxu0
    %v1152 = vadd.f32 %v1090, %v1151
    %1153 = vmatmul.bf16.gmra.mxu0 %v1063
    %v1154 = vpop.f32.mrf.mxu0
    %v1155 = vadd.f32 %v1090, %v1154
    %v1156 = vpop.f32.mrf.mxu0
    %v1157 = vadd.f32 %v1090, %v1156
    %1158 = vmatmul.bf16.gmra.mxu0 %v1064
    %v1159 = vpop.f32.mrf.mxu0
    %v1160 = vadd.f32 %v1090, %v1159
    %v1161 = vpop.f32.mrf.mxu0
    %v1162 = vadd.f32 %v1090, %v1161
    %1163 = vmatmul.bf16.gmra.mxu0 %v1065
    %v1164 = vpop.f32.mrf.mxu0
    %v1165 = vadd.f32 %v1090, %v1164
    %v1166 = vpop.f32.mrf.mxu0
    %v1167 = vadd.f32 %v1090, %v1166
    %1168 = vmatmul.bf16.gmra.mxu0 %v1066
    %v1169 = vpop.f32.mrf.mxu0
    %v1170 = vadd.f32 %v1090, %v1169
    %v1171 = vpop.f32.mrf.mxu0
    %v1172 = vadd.f32 %v1090, %v1171
    %1173 = vmatmul.bf16.gmra.mxu0 %v1067
    %v1174 = vpop.f32.mrf.mxu0
    %v1175 = vadd.f32 %v1090, %v1174
    %v1176 = vpop.f32.mrf.mxu0
    %v1177 = vadd.f32 %v1090, %v1176
    %1178 = vmatmul.bf16.gmra.mxu0 %v1068
    %v1179 = vpop.f32.mrf.mxu0
    %v1180 = vadd.f32 %v1090, %v1179
    %v1181 = vpop.f32.mrf.mxu0
    %v1182 = vadd.f32 %v1090, %v1181
    %1183 = vmatmul.bf16.gmra.mxu0 %v1069
    %v1184 = vpop.f32.mrf.mxu0
    %v1185 = vadd.f32 %v1090, %v1184
    %v1186 = vpop.f32.mrf.mxu0
    %v1187 = vadd.f32 %v1090, %v1186
    %1188 = vdwg.mxu0
    %v1189 = vmax.f32 %v1150, 0.0
    %v1190 = vmax.f32 %v1152, 0.0
    %v1191 = vmax.f32 %v1155, 0.0
    %v1192 = vmax.f32 %v1157, 0.0
    %v1193 = vmax.f32 %v1160, 0.0
    %v1194 = vmax.f32 %v1162, 0.0
    %v1195 = vmax.f32 %v1165, 0.0
    %v1196 = vmax.f32 %v1167, 0.0
    %v1197 = vmax.f32 %v1170, 0.0
    %v1198 = vmax.f32 %v1172, 0.0
    %v1199 = vmax.f32 %v1175, 0.0
    %v1200 = vmax.f32 %v1177, 0.0
    %v1201 = vmax.f32 %v1180, 0.0
    %v1202 = vmax.f32 %v1182, 0.0
    %v1203 = vmax.f32 %v1185, 0.0
    %v1204 = vmax.f32 %v1187, 0.0
    %v1205 = vpack.c.bf16 %v1190, %v1189
    %v1206 = vpack.c.bf16 %v1192, %v1191
    %v1207 = vpack.c.bf16 %v1194, %v1193
    %v1208 = vpack.c.bf16 %v1196, %v1195
    %v1209 = vpack.c.bf16 %v1198, %v1197
    %v1210 = vpack.c.bf16 %v1200, %v1199
    %v1211 = vpack.c.bf16 %v1202, %v1201
    %v1212 = vpack.c.bf16 %v1204, %v1203
    %1213 = vmatpush.bf16.msra.mxu0 %v1212
    %1214 = vmatpush.bf16.msra.mxu0 %v1211
    %1215 = vmatpush.bf16.msra.mxu0 %v1210
    %1216 = vmatpush.bf16.msra.mxu0 %v1209
    %1217 = vmatpush.bf16.msra.mxu0 %v1208
    %1218 = vmatpush.bf16.msra.mxu0 %v1207
    %1219 = vmatpush.bf16.msra.mxu0 %v1206
    %1220 = vmatpush.bf16.msra.mxu0 %v1205
    %1221 = vmatmul.bf16.gmra.mxu0 %v198
    %v1222 = vpop.f32.mrf.mxu0
    %v1223 = vadd.f32 0.0, %v1222
    %v1224 = vpop.f32.mrf.mxu0
    %v1225 = vadd.f32 0.0, %v1224
    %1226 = vmatmul.bf16.gmra.mxu0 %v199
    %v1227 = vpop.f32.mrf.mxu0
    %v1228 = vadd.f32 0.0, %v1227
    %v1229 = vpop.f32.mrf.mxu0
    %v1230 = vadd.f32 0.0, %v1229
    %1231 = vmatmul.bf16.gmra.mxu0 %v200
    %v1232 = vpop.f32.mrf.mxu0
    %v1233 = vadd.f32 0.0, %v1232
    %v1234 = vpop.f32.mrf.mxu0
    %v1235 = vadd.f32 0.0, %v1234
    %1236 = vmatmul.bf16.gmra.mxu0 %v201
    %v1237 = vpop.f32.mrf.mxu0
    %v1238 = vadd.f32 0.0, %v1237
    %v1239 = vpop.f32.mrf.mxu0
    %v1240 = vadd.f32 0.0, %v1239
    %1241 = vmatmul.bf16.gmra.mxu0 %v202
    %v1242 = vpop.f32.mrf.mxu0
    %v1243 = vadd.f32 0.0, %v1242
    %v1244 = vpop.f32.mrf.mxu0
    %v1245 = vadd.f32 0.0, %v1244
    %1246 = vmatmul.bf16.gmra.mxu0 %v203
    %v1247 = vpop.f32.mrf.mxu0
    %v1248 = vadd.f32 0.0, %v1247
    %v1249 = vpop.f32.mrf.mxu0
    %v1250 = vadd.f32 0.0, %v1249
    %1251 = vmatmul.bf16.gmra.mxu0 %v204
    %v1252 = vpop.f32.mrf.mxu0
    %v1253 = vadd.f32 0.0, %v1252
    %v1254 = vpop.f32.mrf.mxu0
    %v1255 = vadd.f32 0.0, %v1254
    %1256 = vmatmul.bf16.gmra.mxu0 %v205
    %v1257 = vpop.f32.mrf.mxu0
    %v1258 = vadd.f32 0.0, %v1257
    %v1259 = vpop.f32.mrf.mxu0
    %v1260 = vadd.f32 0.0, %v1259
    %1261 = vdwg.mxu0
    %v1262 = vadd.f32 %v1189, %v1223
    %v1263 = vadd.f32 %v1190, %v1225
    %v1264 = vadd.f32 %v1191, %v1228
    %v1265 = vadd.f32 %v1192, %v1230
    %v1266 = vadd.f32 %v1193, %v1233
    %v1267 = vadd.f32 %v1194, %v1235
    %v1268 = vadd.f32 %v1195, %v1238
    %v1269 = vadd.f32 %v1196, %v1240
    %v1270 = vadd.f32 %v1197, %v1243
    %v1271 = vadd.f32 %v1198, %v1245
    %v1272 = vadd.f32 %v1199, %v1248
    %v1273 = vadd.f32 %v1200, %v1250
    %v1274 = vadd.f32 %v1201, %v1253
    %v1275 = vadd.f32 %v1202, %v1255
    %v1276 = vadd.f32 %v1203, %v1258
    %v1277 = vadd.f32 %v1204, %v1260
    %v1278 = vpack.c.bf16 %v1263, %v1262
    %v1279 = vpack.c.bf16 %v1265, %v1264
    %v1280 = vpack.c.bf16 %v1267, %v1266
    %v1281 = vpack.c.bf16 %v1269, %v1268
    %v1282 = vpack.c.bf16 %v1271, %v1270
    %v1283 = vpack.c.bf16 %v1273, %v1272
    %v1284 = vpack.c.bf16 %v1275, %v1274
    %v1285 = vpack.c.bf16 %v1277, %v1276
    %s1286 = scalar_lea.vmem [#allocation6], 128
    %v1287 = vld [vmem:[%s1286] sm:$0xf]
    %v1288 = vld [vmem:[%s1286 + $0x4] sm:$0xf]
    %v1289 = vld [vmem:[%s1286 + $0x8] sm:$0xf]
    %v1290 = vld [vmem:[%s1286 + $0xc] sm:$0xf]
    %v1291 = vld [vmem:[%s1286 + $0x10] sm:$0xf]
    %v1292 = vld [vmem:[%s1286 + $0x14] sm:$0xf]
    %v1293 = vld [vmem:[%s1286 + $0x18] sm:$0xf]
    %v1294 = vld [vmem:[%s1286 + $0x1c] sm:$0xf]
    %v1295 = vld [vmem:[%s1286 + $0x20] sm:$0xf]
    %v1296 = vld [vmem:[%s1286 + $0x24] sm:$0xf]
    %v1297 = vld [vmem:[%s1286 + $0x28] sm:$0xf]
    %v1298 = vld [vmem:[%s1286 + $0x2c] sm:$0xf]
    %v1299 = vld [vmem:[%s1286 + $0x30] sm:$0xf]
    %v1300 = vld [vmem:[%s1286 + $0x34] sm:$0xf]
    %v1301 = vld [vmem:[%s1286 + $0x38] sm:$0xf]
    %v1302 = vld [vmem:[%s1286 + $0x3c] sm:$0xf]
    %v1319 = vunpack.c.l.b16 %v1287
    %v1320 = vunpack.c.l.b16 %v1288
    %v1321 = vunpack.c.l.b16 %v1289
    %v1322 = vunpack.c.l.b16 %v1290
    %v1323 = vunpack.c.l.b16 %v1291
    %v1324 = vunpack.c.l.b16 %v1292
    %v1325 = vunpack.c.l.b16 %v1293
    %v1326 = vunpack.c.l.b16 %v1294
    %v1327 = vunpack.c.l.b16 %v1295
    %v1328 = vunpack.c.l.b16 %v1296
    %v1329 = vunpack.c.l.b16 %v1297
    %v1330 = vunpack.c.l.b16 %v1298
    %v1331 = vunpack.c.l.b16 %v1299
    %v1332 = vunpack.c.l.b16 %v1300
    %v1333 = vunpack.c.l.b16 %v1301
    %v1334 = vunpack.c.l.b16 %v1302
    %v1335 = vpack.c.b16 %v1320, %v1319
    %v1336 = vpack.c.b16 %v1322, %v1321
    %v1337 = vpack.c.b16 %v1324, %v1323
    %v1338 = vpack.c.b16 %v1326, %v1325
    %v1339 = vpack.c.b16 %v1328, %v1327
    %v1340 = vpack.c.b16 %v1330, %v1329
    %v1341 = vpack.c.b16 %v1332, %v1331
    %v1342 = vpack.c.b16 %v1334, %v1333
    %1351 = vmatpush.bf16.msra.mxu0 %v1342
    %1352 = vmatpush.bf16.msra.mxu0 %v1341
    %1353 = vmatpush.bf16.msra.mxu0 %v1340
    %1354 = vmatpush.bf16.msra.mxu0 %v1339
    %1355 = vmatpush.bf16.msra.mxu0 %v1338
    %1356 = vmatpush.bf16.msra.mxu0 %v1337
    %1357 = vmatpush.bf16.msra.mxu0 %v1336
    %1358 = vmatpush.bf16.msra.mxu0 %v1335
    %1359 = vmatmul.bf16.gmra.mxu0 %v1278
    %v1360 = vpop.f32.mrf.mxu0
    %v1361 = vadd.f32 0.0, %v1360
    %v1362 = vpop.f32.mrf.mxu0
    %v1363 = vadd.f32 0.0, %v1362
    %1364 = vmatmul.bf16.gmra.mxu0 %v1279
    %v1365 = vpop.f32.mrf.mxu0
    %v1366 = vadd.f32 0.0, %v1365
    %v1367 = vpop.f32.mrf.mxu0
    %v1368 = vadd.f32 0.0, %v1367
    %1369 = vmatmul.bf16.gmra.mxu0 %v1280
    %v1370 = vpop.f32.mrf.mxu0
    %v1371 = vadd.f32 0.0, %v1370
    %v1372 = vpop.f32.mrf.mxu0
    %v1373 = vadd.f32 0.0, %v1372
    %1374 = vmatmul.bf16.gmra.mxu0 %v1281
    %v1375 = vpop.f32.mrf.mxu0
    %v1376 = vadd.f32 0.0, %v1375
    %v1377 = vpop.f32.mrf.mxu0
    %v1378 = vadd.f32 0.0, %v1377
    %1379 = vmatmul.bf16.gmra.mxu0 %v1282
    %v1380 = vpop.f32.mrf.mxu0
    %v1381 = vadd.f32 0.0, %v1380
    %v1382 = vpop.f32.mrf.mxu0
    %v1383 = vadd.f32 0.0, %v1382
    %1384 = vmatmul.bf16.gmra.mxu0 %v1283
    %v1385 = vpop.f32.mrf.mxu0
    %v1386 = vadd.f32 0.0, %v1385
    %v1387 = vpop.f32.mrf.mxu0
    %v1388 = vadd.f32 0.0, %v1387
    %1389 = vmatmul.bf16.gmra.mxu0 %v1284
    %v1390 = vpop.f32.mrf.mxu0
    %v1391 = vadd.f32 0.0, %v1390
    %v1392 = vpop.f32.mrf.mxu0
    %v1393 = vadd.f32 0.0, %v1392
    %1394 = vmatmul.bf16.gmra.mxu0 %v1285
    %v1395 = vpop.f32.mrf.mxu0
    %v1396 = vadd.f32 0.0, %v1395
    %v1397 = vpop.f32.mrf.mxu0
    %v1398 = vadd.f32 0.0, %v1397
    %1399 = vdwg.mxu0
    %v1400 = vadd.f32 %v1361, %v1363
    %v1401 = vadd.f32 %v1400, %v1366
    %v1402 = vadd.f32 %v1401, %v1368
    %v1403 = vadd.f32 %v1402, %v1371
    %v1404 = vadd.f32 %v1403, %v1373
    %v1405 = vadd.f32 %v1404, %v1376
    %v1406 = vadd.f32 %v1405, %v1378
    %v1407 = vadd.f32 %v1406, %v1381
    %v1408 = vadd.f32 %v1407, %v1383
    %v1409 = vadd.f32 %v1408, %v1386
    %v1410 = vadd.f32 %v1409, %v1388
    %v1411 = vadd.f32 %v1410, %v1391
    %v1412 = vadd.f32 %v1411, %v1393
    %v1413 = vadd.f32 %v1412, %v1396
    %v1414 = vadd.f32 %v1413, %v1398
    %v1415 = vrot.slane %v1414, 4
    %v1416 = vadd.f32 %v1414, %v1415
    %v1417 = vrot.slane %v1416, 2
    %v1418 = vadd.f32 %v1416, %v1417
    %v1419 = vrot.slane %v1418, 1
    %v1420 = vadd.f32 %v1418, %v1419
    %v1421 = vmul.f32 %v1361, %v1361
    %v1422 = vmul.f32 %v1363, %v1363
    %v1423 = vmul.f32 %v1366, %v1366
    %v1424 = vmul.f32 %v1368, %v1368
    %v1425 = vmul.f32 %v1371, %v1371
    %v1426 = vmul.f32 %v1373, %v1373
    %v1427 = vmul.f32 %v1376, %v1376
    %v1428 = vmul.f32 %v1378, %v1378
    %v1429 = vmul.f32 %v1381, %v1381
    %v1430 = vmul.f32 %v1383, %v1383
    %v1431 = vmul.f32 %v1386, %v1386
    %v1432 = vmul.f32 %v1388, %v1388
    %v1433 = vmul.f32 %v1391, %v1391
    %v1434 = vmul.f32 %v1393, %v1393
    %v1435 = vmul.f32 %v1396, %v1396
    %v1436 = vmul.f32 %v1398, %v1398
    %v1437 = vadd.f32 %v1421, %v1422
    %v1438 = vadd.f32 %v1437, %v1423
    %v1439 = vadd.f32 %v1438, %v1424
    %v1440 = vadd.f32 %v1439, %v1425
    %v1441 = vadd.f32 %v1440, %v1426
    %v1442 = vadd.f32 %v1441, %v1427
    %v1443 = vadd.f32 %v1442, %v1428
    %v1444 = vadd.f32 %v1443, %v1429
    %v1445 = vadd.f32 %v1444, %v1430
    %v1446 = vadd.f32 %v1445, %v1431
    %v1447 = vadd.f32 %v1446, %v1432
    %v1448 = vadd.f32 %v1447, %v1433
    %v1449 = vadd.f32 %v1448, %v1434
    %v1450 = vadd.f32 %v1449, %v1435
    %v1451 = vadd.f32 %v1450, %v1436
    %v1452 = vrot.slane %v1451, 4
    %v1453 = vadd.f32 %v1451, %v1452
    %v1454 = vrot.slane %v1453, 2
    %v1455 = vadd.f32 %v1453, %v1454
    %v1456 = vrot.slane %v1455, 1
    %v1457 = vadd.f32 %v1455, %v1456
    %v1458 = vmul.f32 %v1420, 0.0078125
    %v1459 = vmul.f32 %v1457, 0.0078125
    %v1460 = vmul.f32 %v1458, %v1458
    %v1461 = vsub.f32 %v1459, %v1460
    %v1462 = vmax.f32 %v1461, 0.0
    %v1463 = vsub.f32 %v1361, %v1458
    %v1464 = vsub.f32 %v1363, %v1458
    %v1465 = vsub.f32 %v1366, %v1458
    %v1466 = vsub.f32 %v1368, %v1458
    %v1467 = vsub.f32 %v1371, %v1458
    %v1468 = vsub.f32 %v1373, %v1458
    %v1469 = vsub.f32 %v1376, %v1458
    %v1470 = vsub.f32 %v1378, %v1458
    %v1471 = vsub.f32 %v1381, %v1458
    %v1472 = vsub.f32 %v1383, %v1458
    %v1473 = vsub.f32 %v1386, %v1458
    %v1474 = vsub.f32 %v1388, %v1458
    %v1475 = vsub.f32 %v1391, %v1458
    %v1476 = vsub.f32 %v1393, %v1458
    %v1477 = vsub.f32 %v1396, %v1458
    %v1478 = vsub.f32 %v1398, %v1458
    %v1479 = vadd.f32 %v1462, 1e-05
    %v1480 = vrsqrt.pop %v1479
    %v1481 = vmul.f32 %v1480, %v1479
    %v1482 = vmul.f32 %v1481, %v1480
    %v1483 = vmul.f32 0.5, %v1482
    %v1484 = vsub.f32 1.5, %v1483
    %v1485 = vmul.f32 %v1480, %v1484
    %vm1486 = vweird.f32 %v1479
    %vm1487 = vweird.f32 %v1480
    %vm1488 = vmor %vm1486, %vm1487
    %v1489 = vsel %vm1488, %v1480, %v1485
    %v1490 = vmul.f32 %v1463, %v1489
    %v1491 = vmul.f32 %v1464, %v1489
    %v1492 = vmul.f32 %v1465, %v1489
    %v1493 = vmul.f32 %v1466, %v1489
    %v1494 = vmul.f32 %v1467, %v1489
    %v1495 = vmul.f32 %v1468, %v1489
    %v1496 = vmul.f32 %v1469, %v1489
    %v1497 = vmul.f32 %v1470, %v1489
    %v1498 = vmul.f32 %v1471, %v1489
    %v1499 = vmul.f32 %v1472, %v1489
    %v1500 = vmul.f32 %v1473, %v1489
    %v1501 = vmul.f32 %v1474, %v1489
    %v1502 = vmul.f32 %v1475, %v1489
    %v1503 = vmul.f32 %v1476, %v1489
    %v1504 = vmul.f32 %v1477, %v1489
    %v1505 = vmul.f32 %v1478, %v1489
    %s1506 = scalar_lea.vmem %s3, 2
    %v1507 = vld [vmem:[%s1506] sm:$0x1]
    %v1509 = vperm.slane %v1507, 0
    %v1511 = vmul.f32 %v1490, %v1509
    %v1512 = vmul.f32 %v1491, %v1509
    %v1513 = vmul.f32 %v1492, %v1509
    %v1514 = vmul.f32 %v1493, %v1509
    %v1515 = vmul.f32 %v1494, %v1509
    %v1516 = vmul.f32 %v1495, %v1509
    %v1517 = vmul.f32 %v1496, %v1509
    %v1518 = vmul.f32 %v1497, %v1509
    %v1519 = vmul.f32 %v1498, %v1509
    %v1520 = vmul.f32 %v1499, %v1509
    %v1521 = vmul.f32 %v1500, %v1509
    %v1522 = vmul.f32 %v1501, %v1509
    %v1523 = vmul.f32 %v1502, %v1509
    %v1524 = vmul.f32 %v1503, %v1509
    %v1525 = vmul.f32 %v1504, %v1509
    %v1526 = vmul.f32 %v1505, %v1509
    %s1527 = scalar_lea.vmem [#allocation7], 2
    %v1528 = vld [vmem:[%s1527] sm:$0x1]
    %v1530 = vperm.slane %v1528, 0
    %v1532 = vadd.f32 %v1511, %v1530
    %v1533 = vadd.f32 %v1512, %v1530
    %v1534 = vadd.f32 %v1513, %v1530
    %v1535 = vadd.f32 %v1514, %v1530
    %v1536 = vadd.f32 %v1515, %v1530
    %v1537 = vadd.f32 %v1516, %v1530
    %v1538 = vadd.f32 %v1517, %v1530
    %v1539 = vadd.f32 %v1518, %v1530
    %v1540 = vadd.f32 %v1519, %v1530
    %v1541 = vadd.f32 %v1520, %v1530
    %v1542 = vadd.f32 %v1521, %v1530
    %v1543 = vadd.f32 %v1522, %v1530
    %v1544 = vadd.f32 %v1523, %v1530
    %v1545 = vadd.f32 %v1524, %v1530
    %v1546 = vadd.f32 %v1525, %v1530
    %v1547 = vadd.f32 %v1526, %v1530
    %v1548 = vmax.f32 %v1532, 0.0
    %v1549 = vmax.f32 %v1533, 0.0
    %v1550 = vmax.f32 %v1534, 0.0
    %v1551 = vmax.f32 %v1535, 0.0
    %v1552 = vmax.f32 %v1536, 0.0
    %v1553 = vmax.f32 %v1537, 0.0
    %v1554 = vmax.f32 %v1538, 0.0
    %v1555 = vmax.f32 %v1539, 0.0
    %v1556 = vmax.f32 %v1540, 0.0
    %v1557 = vmax.f32 %v1541, 0.0
    %v1558 = vmax.f32 %v1542, 0.0
    %v1559 = vmax.f32 %v1543, 0.0
    %v1560 = vmax.f32 %v1544, 0.0
    %v1561 = vmax.f32 %v1545, 0.0
    %v1562 = vmax.f32 %v1546, 0.0
    %v1563 = vmax.f32 %v1547, 0.0
    %v1564 = vpack.c.bf16 %v1549, %v1548
    %v1565 = vpack.c.bf16 %v1551, %v1550
    %v1566 = vpack.c.bf16 %v1553, %v1552
    %v1567 = vpack.c.bf16 %v1555, %v1554
    %v1568 = vpack.c.bf16 %v1557, %v1556
    %v1569 = vpack.c.bf16 %v1559, %v1558
    %v1570 = vpack.c.bf16 %v1561, %v1560
    %v1571 = vpack.c.bf16 %v1563, %v1562
    %s1572 = scalar_lea.vmem [#allocation9], 128
    %v1573 = vld [vmem:[%s1572] sm:$0xf]
    %v1574 = vld [vmem:[%s1572 + $0x4] sm:$0xf]
    %v1575 = vld [vmem:[%s1572 + $0x8] sm:$0xf]
    %v1576 = vld [vmem:[%s1572 + $0xc] sm:$0xf]
    %v1577 = vld [vmem:[%s1572 + $0x10] sm:$0xf]
    %v1578 = vld [vmem:[%s1572 + $0x14] sm:$0xf]
    %v1579 = vld [vmem:[%s1572 + $0x18] sm:$0xf]
    %v1580 = vld [vmem:[%s1572 + $0x1c] sm:$0xf]
    %v1581 = vld [vmem:[%s1572 + $0x20] sm:$0xf]
    %v1582 = vld [vmem:[%s1572 + $0x24] sm:$0xf]
    %v1583 = vld [vmem:[%s1572 + $0x28] sm:$0xf]
    %v1584 = vld [vmem:[%s1572 + $0x2c] sm:$0xf]
    %v1585 = vld [vmem:[%s1572 + $0x30] sm:$0xf]
    %v1586 = vld [vmem:[%s1572 + $0x34] sm:$0xf]
    %v1587 = vld [vmem:[%s1572 + $0x38] sm:$0xf]
    %v1588 = vld [vmem:[%s1572 + $0x3c] sm:$0xf]
    %s1589 = scalar_lea.vmem [#allocation10], 2
    %v1590 = vld [vmem:[%s1589] sm:$0x1]
    %v1592 = vperm.slane %v1590, 0
    %v1610 = vunpack.c.l.b16 %v1573
    %v1611 = vunpack.c.l.b16 %v1574
    %v1612 = vunpack.c.l.b16 %v1575
    %v1613 = vunpack.c.l.b16 %v1576
    %v1614 = vunpack.c.l.b16 %v1577
    %v1615 = vunpack.c.l.b16 %v1578
    %v1616 = vunpack.c.l.b16 %v1579
    %v1617 = vunpack.c.l.b16 %v1580
    %v1618 = vunpack.c.l.b16 %v1581
    %v1619 = vunpack.c.l.b16 %v1582
    %v1620 = vunpack.c.l.b16 %v1583
    %v1621 = vunpack.c.l.b16 %v1584
    %v1622 = vunpack.c.l.b16 %v1585
    %v1623 = vunpack.c.l.b16 %v1586
    %v1624 = vunpack.c.l.b16 %v1587
    %v1625 = vunpack.c.l.b16 %v1588
    %v1626 = vpack.c.b16 %v1611, %v1610
    %v1627 = vpack.c.b16 %v1613, %v1612
    %v1628 = vpack.c.b16 %v1615, %v1614
    %v1629 = vpack.c.b16 %v1617, %v1616
    %v1630 = vpack.c.b16 %v1619, %v1618
    %v1631 = vpack.c.b16 %v1621, %v1620
    %v1632 = vpack.c.b16 %v1623, %v1622
    %v1633 = vpack.c.b16 %v1625, %v1624
    %1642 = vmatpush.bf16.msra.mxu0 %v1633
    %1643 = vmatpush.bf16.msra.mxu0 %v1632
    %1644 = vmatpush.bf16.msra.mxu0 %v1631
    %1645 = vmatpush.bf16.msra.mxu0 %v1630
    %1646 = vmatpush.bf16.msra.mxu0 %v1629
    %1647 = vmatpush.bf16.msra.mxu0 %v1628
    %1648 = vmatpush.bf16.msra.mxu0 %v1627
    %1649 = vmatpush.bf16.msra.mxu0 %v1626
    %1650 = vmatmul.bf16.gmra.mxu0 %v1564
    %v1651 = vpop.f32.mrf.mxu0
    %v1652 = vadd.f32 %v1592, %v1651
    %v1653 = vpop.f32.mrf.mxu0
    %v1654 = vadd.f32 %v1592, %v1653
    %1655 = vmatmul.bf16.gmra.mxu0 %v1565
    %v1656 = vpop.f32.mrf.mxu0
    %v1657 = vadd.f32 %v1592, %v1656
    %v1658 = vpop.f32.mrf.mxu0
    %v1659 = vadd.f32 %v1592, %v1658
    %1660 = vmatmul.bf16.gmra.mxu0 %v1566
    %v1661 = vpop.f32.mrf.mxu0
    %v1662 = vadd.f32 %v1592, %v1661
    %v1663 = vpop.f32.mrf.mxu0
    %v1664 = vadd.f32 %v1592, %v1663
    %1665 = vmatmul.bf16.gmra.mxu0 %v1567
    %v1666 = vpop.f32.mrf.mxu0
    %v1667 = vadd.f32 %v1592, %v1666
    %v1668 = vpop.f32.mrf.mxu0
    %v1669 = vadd.f32 %v1592, %v1668
    %1670 = vmatmul.bf16.gmra.mxu0 %v1568
    %v1671 = vpop.f32.mrf.mxu0
    %v1672 = vadd.f32 %v1592, %v1671
    %v1673 = vpop.f32.mrf.mxu0
    %v1674 = vadd.f32 %v1592, %v1673
    %1675 = vmatmul.bf16.gmra.mxu0 %v1569
    %v1676 = vpop.f32.mrf.mxu0
    %v1677 = vadd.f32 %v1592, %v1676
    %v1678 = vpop.f32.mrf.mxu0
    %v1679 = vadd.f32 %v1592, %v1678
    %1680 = vmatmul.bf16.gmra.mxu0 %v1570
    %v1681 = vpop.f32.mrf.mxu0
    %v1682 = vadd.f32 %v1592, %v1681
    %v1683 = vpop.f32.mrf.mxu0
    %v1684 = vadd.f32 %v1592, %v1683
    %1685 = vmatmul.bf16.gmra.mxu0 %v1571
    %v1686 = vpop.f32.mrf.mxu0
    %v1687 = vadd.f32 %v1592, %v1686
    %v1688 = vpop.f32.mrf.mxu0
    %v1689 = vadd.f32 %v1592, %v1688
    %1690 = vdwg.mxu0
    %v1691 = vmax.f32 %v1652, 0.0
    %v1692 = vmax.f32 %v1654, 0.0
    %v1693 = vmax.f32 %v1657, 0.0
    %v1694 = vmax.f32 %v1659, 0.0
    %v1695 = vmax.f32 %v1662, 0.0
    %v1696 = vmax.f32 %v1664, 0.0
    %v1697 = vmax.f32 %v1667, 0.0
    %v1698 = vmax.f32 %v1669, 0.0
    %v1699 = vmax.f32 %v1672, 0.0
    %v1700 = vmax.f32 %v1674, 0.0
    %v1701 = vmax.f32 %v1677, 0.0
    %v1702 = vmax.f32 %v1679, 0.0
    %v1703 = vmax.f32 %v1682, 0.0
    %v1704 = vmax.f32 %v1684, 0.0
    %v1705 = vmax.f32 %v1687, 0.0
    %v1706 = vmax.f32 %v1689, 0.0
    %v1707 = vpack.c.bf16 %v1692, %v1691
    %v1708 = vpack.c.bf16 %v1694, %v1693
    %v1709 = vpack.c.bf16 %v1696, %v1695
    %v1710 = vpack.c.bf16 %v1698, %v1697
    %v1711 = vpack.c.bf16 %v1700, %v1699
    %v1712 = vpack.c.bf16 %v1702, %v1701
    %v1713 = vpack.c.bf16 %v1704, %v1703
    %v1714 = vpack.c.bf16 %v1706, %v1705
    %1715 = vmatpush.bf16.msra.mxu0 %v1714
    %1716 = vmatpush.bf16.msra.mxu0 %v1713
    %1717 = vmatpush.bf16.msra.mxu0 %v1712
    %1718 = vmatpush.bf16.msra.mxu0 %v1711
    %1719 = vmatpush.bf16.msra.mxu0 %v1710
    %1720 = vmatpush.bf16.msra.mxu0 %v1709
    %1721 = vmatpush.bf16.msra.mxu0 %v1708
    %1722 = vmatpush.bf16.msra.mxu0 %v1707
    %1723 = vmatmul.bf16.gmra.mxu0 %v198
    %v1724 = vpop.f32.mrf.mxu0
    %v1725 = vadd.f32 0.0, %v1724
    %v1726 = vpop.f32.mrf.mxu0
    %v1727 = vadd.f32 0.0, %v1726
    %1728 = vmatmul.bf16.gmra.mxu0 %v199
    %v1729 = vpop.f32.mrf.mxu0
    %v1730 = vadd.f32 0.0, %v1729
    %v1731 = vpop.f32.mrf.mxu0
    %v1732 = vadd.f32 0.0, %v1731
    %1733 = vmatmul.bf16.gmra.mxu0 %v200
    %v1734 = vpop.f32.mrf.mxu0
    %v1735 = vadd.f32 0.0, %v1734
    %v1736 = vpop.f32.mrf.mxu0
    %v1737 = vadd.f32 0.0, %v1736
    %1738 = vmatmul.bf16.gmra.mxu0 %v201
    %v1739 = vpop.f32.mrf.mxu0
    %v1740 = vadd.f32 0.0, %v1739
    %v1741 = vpop.f32.mrf.mxu0
    %v1742 = vadd.f32 0.0, %v1741
    %1743 = vmatmul.bf16.gmra.mxu0 %v202
    %v1744 = vpop.f32.mrf.mxu0
    %v1745 = vadd.f32 0.0, %v1744
    %v1746 = vpop.f32.mrf.mxu0
    %v1747 = vadd.f32 0.0, %v1746
    %1748 = vmatmul.bf16.gmra.mxu0 %v203
    %v1749 = vpop.f32.mrf.mxu0
    %v1750 = vadd.f32 0.0, %v1749
    %v1751 = vpop.f32.mrf.mxu0
    %v1752 = vadd.f32 0.0, %v1751
    %1753 = vmatmul.bf16.gmra.mxu0 %v204
    %v1754 = vpop.f32.mrf.mxu0
    %v1755 = vadd.f32 0.0, %v1754
    %v1756 = vpop.f32.mrf.mxu0
    %v1757 = vadd.f32 0.0, %v1756
    %1758 = vmatmul.bf16.gmra.mxu0 %v205
    %v1759 = vpop.f32.mrf.mxu0
    %v1760 = vadd.f32 0.0, %v1759
    %v1761 = vpop.f32.mrf.mxu0
    %v1762 = vadd.f32 0.0, %v1761
    %1763 = vdwg.mxu0
    %v1764 = vadd.f32 %v1691, %v1725
    %v1765 = vadd.f32 %v1692, %v1727
    %v1766 = vadd.f32 %v1693, %v1730
    %v1767 = vadd.f32 %v1694, %v1732
    %v1768 = vadd.f32 %v1695, %v1735
    %v1769 = vadd.f32 %v1696, %v1737
    %v1770 = vadd.f32 %v1697, %v1740
    %v1771 = vadd.f32 %v1698, %v1742
    %v1772 = vadd.f32 %v1699, %v1745
    %v1773 = vadd.f32 %v1700, %v1747
    %v1774 = vadd.f32 %v1701, %v1750
    %v1775 = vadd.f32 %v1702, %v1752
    %v1776 = vadd.f32 %v1703, %v1755
    %v1777 = vadd.f32 %v1704, %v1757
    %v1778 = vadd.f32 %v1705, %v1760
    %v1779 = vadd.f32 %v1706, %v1762
    %v1780 = vpack.c.bf16 %v1765, %v1764
    %v1781 = vpack.c.bf16 %v1767, %v1766
    %v1782 = vpack.c.bf16 %v1769, %v1768
    %v1783 = vpack.c.bf16 %v1771, %v1770
    %v1784 = vpack.c.bf16 %v1773, %v1772
    %v1785 = vpack.c.bf16 %v1775, %v1774
    %v1786 = vpack.c.bf16 %v1777, %v1776
    %v1787 = vpack.c.bf16 %v1779, %v1778
    %s1788 = scalar_lea.vmem [#allocation6], 192
    %v1789 = vld [vmem:[%s1788] sm:$0xf]
    %v1790 = vld [vmem:[%s1788 + $0x4] sm:$0xf]
    %v1791 = vld [vmem:[%s1788 + $0x8] sm:$0xf]
    %v1792 = vld [vmem:[%s1788 + $0xc] sm:$0xf]
    %v1793 = vld [vmem:[%s1788 + $0x10] sm:$0xf]
    %v1794 = vld [vmem:[%s1788 + $0x14] sm:$0xf]
    %v1795 = vld [vmem:[%s1788 + $0x18] sm:$0xf]
    %v1796 = vld [vmem:[%s1788 + $0x1c] sm:$0xf]
    %v1797 = vld [vmem:[%s1788 + $0x20] sm:$0xf]
    %v1798 = vld [vmem:[%s1788 + $0x24] sm:$0xf]
    %v1799 = vld [vmem:[%s1788 + $0x28] sm:$0xf]
    %v1800 = vld [vmem:[%s1788 + $0x2c] sm:$0xf]
    %v1801 = vld [vmem:[%s1788 + $0x30] sm:$0xf]
    %v1802 = vld [vmem:[%s1788 + $0x34] sm:$0xf]
    %v1803 = vld [vmem:[%s1788 + $0x38] sm:$0xf]
    %v1804 = vld [vmem:[%s1788 + $0x3c] sm:$0xf]
    %v1821 = vunpack.c.l.b16 %v1789
    %v1822 = vunpack.c.l.b16 %v1790
    %v1823 = vunpack.c.l.b16 %v1791
    %v1824 = vunpack.c.l.b16 %v1792
    %v1825 = vunpack.c.l.b16 %v1793
    %v1826 = vunpack.c.l.b16 %v1794
    %v1827 = vunpack.c.l.b16 %v1795
    %v1828 = vunpack.c.l.b16 %v1796
    %v1829 = vunpack.c.l.b16 %v1797
    %v1830 = vunpack.c.l.b16 %v1798
    %v1831 = vunpack.c.l.b16 %v1799
    %v1832 = vunpack.c.l.b16 %v1800
    %v1833 = vunpack.c.l.b16 %v1801
    %v1834 = vunpack.c.l.b16 %v1802
    %v1835 = vunpack.c.l.b16 %v1803
    %v1836 = vunpack.c.l.b16 %v1804
    %v1837 = vpack.c.b16 %v1822, %v1821
    %v1838 = vpack.c.b16 %v1824, %v1823
    %v1839 = vpack.c.b16 %v1826, %v1825
    %v1840 = vpack.c.b16 %v1828, %v1827
    %v1841 = vpack.c.b16 %v1830, %v1829
    %v1842 = vpack.c.b16 %v1832, %v1831
    %v1843 = vpack.c.b16 %v1834, %v1833
    %v1844 = vpack.c.b16 %v1836, %v1835
    %1853 = vmatpush.bf16.msra.mxu0 %v1844
    %1854 = vmatpush.bf16.msra.mxu0 %v1843
    %1855 = vmatpush.bf16.msra.mxu0 %v1842
    %1856 = vmatpush.bf16.msra.mxu0 %v1841
    %1857 = vmatpush.bf16.msra.mxu0 %v1840
    %1858 = vmatpush.bf16.msra.mxu0 %v1839
    %1859 = vmatpush.bf16.msra.mxu0 %v1838
    %1860 = vmatpush.bf16.msra.mxu0 %v1837
    %1861 = vmatmul.bf16.gmra.mxu0 %v1780
    %v1862 = vpop.f32.mrf.mxu0
    %v1863 = vadd.f32 0.0, %v1862
    %v1864 = vpop.f32.mrf.mxu0
    %v1865 = vadd.f32 0.0, %v1864
    %1866 = vmatmul.bf16.gmra.mxu0 %v1781
    %v1867 = vpop.f32.mrf.mxu0
    %v1868 = vadd.f32 0.0, %v1867
    %v1869 = vpop.f32.mrf.mxu0
    %v1870 = vadd.f32 0.0, %v1869
    %1871 = vmatmul.bf16.gmra.mxu0 %v1782
    %v1872 = vpop.f32.mrf.mxu0
    %v1873 = vadd.f32 0.0, %v1872
    %v1874 = vpop.f32.mrf.mxu0
    %v1875 = vadd.f32 0.0, %v1874
    %1876 = vmatmul.bf16.gmra.mxu0 %v1783
    %v1877 = vpop.f32.mrf.mxu0
    %v1878 = vadd.f32 0.0, %v1877
    %v1879 = vpop.f32.mrf.mxu0
    %v1880 = vadd.f32 0.0, %v1879
    %1881 = vmatmul.bf16.gmra.mxu0 %v1784
    %v1882 = vpop.f32.mrf.mxu0
    %v1883 = vadd.f32 0.0, %v1882
    %v1884 = vpop.f32.mrf.mxu0
    %v1885 = vadd.f32 0.0, %v1884
    %1886 = vmatmul.bf16.gmra.mxu0 %v1785
    %v1887 = vpop.f32.mrf.mxu0
    %v1888 = vadd.f32 0.0, %v1887
    %v1889 = vpop.f32.mrf.mxu0
    %v1890 = vadd.f32 0.0, %v1889
    %1891 = vmatmul.bf16.gmra.mxu0 %v1786
    %v1892 = vpop.f32.mrf.mxu0
    %v1893 = vadd.f32 0.0, %v1892
    %v1894 = vpop.f32.mrf.mxu0
    %v1895 = vadd.f32 0.0, %v1894
    %1896 = vmatmul.bf16.gmra.mxu0 %v1787
    %v1897 = vpop.f32.mrf.mxu0
    %v1898 = vadd.f32 0.0, %v1897
    %v1899 = vpop.f32.mrf.mxu0
    %v1900 = vadd.f32 0.0, %v1899
    %1901 = vdwg.mxu0
    %v1902 = vadd.f32 %v1863, %v1865
    %v1903 = vadd.f32 %v1902, %v1868
    %v1904 = vadd.f32 %v1903, %v1870
    %v1905 = vadd.f32 %v1904, %v1873
    %v1906 = vadd.f32 %v1905, %v1875
    %v1907 = vadd.f32 %v1906, %v1878
    %v1908 = vadd.f32 %v1907, %v1880
    %v1909 = vadd.f32 %v1908, %v1883
    %v1910 = vadd.f32 %v1909, %v1885
    %v1911 = vadd.f32 %v1910, %v1888
    %v1912 = vadd.f32 %v1911, %v1890
    %v1913 = vadd.f32 %v1912, %v1893
    %v1914 = vadd.f32 %v1913, %v1895
    %v1915 = vadd.f32 %v1914, %v1898
    %v1916 = vadd.f32 %v1915, %v1900
    %v1917 = vrot.slane %v1916, 4
    %v1918 = vadd.f32 %v1916, %v1917
    %v1919 = vrot.slane %v1918, 2
    %v1920 = vadd.f32 %v1918, %v1919
    %v1921 = vrot.slane %v1920, 1
    %v1922 = vadd.f32 %v1920, %v1921
    %v1923 = vmul.f32 %v1863, %v1863
    %v1924 = vmul.f32 %v1865, %v1865
    %v1925 = vmul.f32 %v1868, %v1868
    %v1926 = vmul.f32 %v1870, %v1870
    %v1927 = vmul.f32 %v1873, %v1873
    %v1928 = vmul.f32 %v1875, %v1875
    %v1929 = vmul.f32 %v1878, %v1878
    %v1930 = vmul.f32 %v1880, %v1880
    %v1931 = vmul.f32 %v1883, %v1883
    %v1932 = vmul.f32 %v1885, %v1885
    %v1933 = vmul.f32 %v1888, %v1888
    %v1934 = vmul.f32 %v1890, %v1890
    %v1935 = vmul.f32 %v1893, %v1893
    %v1936 = vmul.f32 %v1895, %v1895
    %v1937 = vmul.f32 %v1898, %v1898
    %v1938 = vmul.f32 %v1900, %v1900
    %v1939 = vadd.f32 %v1923, %v1924
    %v1940 = vadd.f32 %v1939, %v1925
    %v1941 = vadd.f32 %v1940, %v1926
    %v1942 = vadd.f32 %v1941, %v1927
    %v1943 = vadd.f32 %v1942, %v1928
    %v1944 = vadd.f32 %v1943, %v1929
    %v1945 = vadd.f32 %v1944, %v1930
    %v1946 = vadd.f32 %v1945, %v1931
    %v1947 = vadd.f32 %v1946, %v1932
    %v1948 = vadd.f32 %v1947, %v1933
    %v1949 = vadd.f32 %v1948, %v1934
    %v1950 = vadd.f32 %v1949, %v1935
    %v1951 = vadd.f32 %v1950, %v1936
    %v1952 = vadd.f32 %v1951, %v1937
    %v1953 = vadd.f32 %v1952, %v1938
    %v1954 = vrot.slane %v1953, 4
    %v1955 = vadd.f32 %v1953, %v1954
    %v1956 = vrot.slane %v1955, 2
    %v1957 = vadd.f32 %v1955, %v1956
    %v1958 = vrot.slane %v1957, 1
    %v1959 = vadd.f32 %v1957, %v1958
    %v1960 = vmul.f32 %v1922, 0.0078125
    %v1961 = vmul.f32 %v1959, 0.0078125
    %v1962 = vmul.f32 %v1960, %v1960
    %v1963 = vsub.f32 %v1961, %v1962
    %v1964 = vmax.f32 %v1963, 0.0
    %v1965 = vsub.f32 %v1863, %v1960
    %v1966 = vsub.f32 %v1865, %v1960
    %v1967 = vsub.f32 %v1868, %v1960
    %v1968 = vsub.f32 %v1870, %v1960
    %v1969 = vsub.f32 %v1873, %v1960
    %v1970 = vsub.f32 %v1875, %v1960
    %v1971 = vsub.f32 %v1878, %v1960
    %v1972 = vsub.f32 %v1880, %v1960
    %v1973 = vsub.f32 %v1883, %v1960
    %v1974 = vsub.f32 %v1885, %v1960
    %v1975 = vsub.f32 %v1888, %v1960
    %v1976 = vsub.f32 %v1890, %v1960
    %v1977 = vsub.f32 %v1893, %v1960
    %v1978 = vsub.f32 %v1895, %v1960
    %v1979 = vsub.f32 %v1898, %v1960
    %v1980 = vsub.f32 %v1900, %v1960
    %v1981 = vadd.f32 %v1964, 1e-05
    %v1982 = vrsqrt.pop %v1981
    %v1983 = vmul.f32 %v1982, %v1981
    %v1984 = vmul.f32 %v1983, %v1982
    %v1985 = vmul.f32 0.5, %v1984
    %v1986 = vsub.f32 1.5, %v1985
    %v1987 = vmul.f32 %v1982, %v1986
    %vm1988 = vweird.f32 %v1981
    %vm1989 = vweird.f32 %v1982
    %vm1990 = vmor %vm1988, %vm1989
    %v1991 = vsel %vm1990, %v1982, %v1987
    %v1992 = vmul.f32 %v1965, %v1991
    %v1993 = vmul.f32 %v1966, %v1991
    %v1994 = vmul.f32 %v1967, %v1991
    %v1995 = vmul.f32 %v1968, %v1991
    %v1996 = vmul.f32 %v1969, %v1991
    %v1997 = vmul.f32 %v1970, %v1991
    %v1998 = vmul.f32 %v1971, %v1991
    %v1999 = vmul.f32 %v1972, %v1991
    %v2000 = vmul.f32 %v1973, %v1991
    %v2001 = vmul.f32 %v1974, %v1991
    %v2002 = vmul.f32 %v1975, %v1991
    %v2003 = vmul.f32 %v1976, %v1991
    %v2004 = vmul.f32 %v1977, %v1991
    %v2005 = vmul.f32 %v1978, %v1991
    %v2006 = vmul.f32 %v1979, %v1991
    %v2007 = vmul.f32 %v1980, %v1991
    %s2008 = scalar_lea.vmem %s3, 3
    %v2009 = vld [vmem:[%s2008] sm:$0x1]
    %v2011 = vperm.slane %v2009, 0
    %v2013 = vmul.f32 %v1992, %v2011
    %v2014 = vmul.f32 %v1993, %v2011
    %v2015 = vmul.f32 %v1994, %v2011
    %v2016 = vmul.f32 %v1995, %v2011
    %v2017 = vmul.f32 %v1996, %v2011
    %v2018 = vmul.f32 %v1997, %v2011
    %v2019 = vmul.f32 %v1998, %v2011
    %v2020 = vmul.f32 %v1999, %v2011
    %v2021 = vmul.f32 %v2000, %v2011
    %v2022 = vmul.f32 %v2001, %v2011
    %v2023 = vmul.f32 %v2002, %v2011
    %v2024 = vmul.f32 %v2003, %v2011
    %v2025 = vmul.f32 %v2004, %v2011
    %v2026 = vmul.f32 %v2005, %v2011
    %v2027 = vmul.f32 %v2006, %v2011
    %v2028 = vmul.f32 %v2007, %v2011
    %s2029 = scalar_lea.vmem [#allocation7], 3
    %v2030 = vld [vmem:[%s2029] sm:$0x1]
    %v2032 = vperm.slane %v2030, 0
    %v2034 = vadd.f32 %v2013, %v2032
    %v2035 = vadd.f32 %v2014, %v2032
    %v2036 = vadd.f32 %v2015, %v2032
    %v2037 = vadd.f32 %v2016, %v2032
    %v2038 = vadd.f32 %v2017, %v2032
    %v2039 = vadd.f32 %v2018, %v2032
    %v2040 = vadd.f32 %v2019, %v2032
    %v2041 = vadd.f32 %v2020, %v2032
    %v2042 = vadd.f32 %v2021, %v2032
    %v2043 = vadd.f32 %v2022, %v2032
    %v2044 = vadd.f32 %v2023, %v2032
    %v2045 = vadd.f32 %v2024, %v2032
    %v2046 = vadd.f32 %v2025, %v2032
    %v2047 = vadd.f32 %v2026, %v2032
    %v2048 = vadd.f32 %v2027, %v2032
    %v2049 = vadd.f32 %v2028, %v2032
    %v2050 = vmax.f32 %v2034, 0.0
    %v2051 = vmax.f32 %v2035, 0.0
    %v2052 = vmax.f32 %v2036, 0.0
    %v2053 = vmax.f32 %v2037, 0.0
    %v2054 = vmax.f32 %v2038, 0.0
    %v2055 = vmax.f32 %v2039, 0.0
    %v2056 = vmax.f32 %v2040, 0.0
    %v2057 = vmax.f32 %v2041, 0.0
    %v2058 = vmax.f32 %v2042, 0.0
    %v2059 = vmax.f32 %v2043, 0.0
    %v2060 = vmax.f32 %v2044, 0.0
    %v2061 = vmax.f32 %v2045, 0.0
    %v2062 = vmax.f32 %v2046, 0.0
    %v2063 = vmax.f32 %v2047, 0.0
    %v2064 = vmax.f32 %v2048, 0.0
    %v2065 = vmax.f32 %v2049, 0.0
    %v2066 = vpack.c.bf16 %v2051, %v2050
    %v2067 = vpack.c.bf16 %v2053, %v2052
    %v2068 = vpack.c.bf16 %v2055, %v2054
    %v2069 = vpack.c.bf16 %v2057, %v2056
    %v2070 = vpack.c.bf16 %v2059, %v2058
    %v2071 = vpack.c.bf16 %v2061, %v2060
    %v2072 = vpack.c.bf16 %v2063, %v2062
    %v2073 = vpack.c.bf16 %v2065, %v2064
    %s2074 = scalar_lea.vmem [#allocation9], 192
    %v2075 = vld [vmem:[%s2074] sm:$0xf]
    %v2076 = vld [vmem:[%s2074 + $0x4] sm:$0xf]
    %v2077 = vld [vmem:[%s2074 + $0x8] sm:$0xf]
    %v2078 = vld [vmem:[%s2074 + $0xc] sm:$0xf]
    %v2079 = vld [vmem:[%s2074 + $0x10] sm:$0xf]
    %v2080 = vld [vmem:[%s2074 + $0x14] sm:$0xf]
    %v2081 = vld [vmem:[%s2074 + $0x18] sm:$0xf]
    %v2082 = vld [vmem:[%s2074 + $0x1c] sm:$0xf]
    %v2083 = vld [vmem:[%s2074 + $0x20] sm:$0xf]
    %v2084 = vld [vmem:[%s2074 + $0x24] sm:$0xf]
    %v2085 = vld [vmem:[%s2074 + $0x28] sm:$0xf]
    %v2086 = vld [vmem:[%s2074 + $0x2c] sm:$0xf]
    %v2087 = vld [vmem:[%s2074 + $0x30] sm:$0xf]
    %v2088 = vld [vmem:[%s2074 + $0x34] sm:$0xf]
    %v2089 = vld [vmem:[%s2074 + $0x38] sm:$0xf]
    %v2090 = vld [vmem:[%s2074 + $0x3c] sm:$0xf]
    %s2091 = scalar_lea.vmem [#allocation10], 3
    %v2092 = vld [vmem:[%s2091] sm:$0x1]
    %v2094 = vperm.slane %v2092, 0
    %v2112 = vunpack.c.l.b16 %v2075
    %v2113 = vunpack.c.l.b16 %v2076
    %v2114 = vunpack.c.l.b16 %v2077
    %v2115 = vunpack.c.l.b16 %v2078
    %v2116 = vunpack.c.l.b16 %v2079
    %v2117 = vunpack.c.l.b16 %v2080
    %v2118 = vunpack.c.l.b16 %v2081
    %v2119 = vunpack.c.l.b16 %v2082
    %v2120 = vunpack.c.l.b16 %v2083
    %v2121 = vunpack.c.l.b16 %v2084
    %v2122 = vunpack.c.l.b16 %v2085
    %v2123 = vunpack.c.l.b16 %v2086
    %v2124 = vunpack.c.l.b16 %v2087
    %v2125 = vunpack.c.l.b16 %v2088
    %v2126 = vunpack.c.l.b16 %v2089
    %v2127 = vunpack.c.l.b16 %v2090
    %v2128 = vpack.c.b16 %v2113, %v2112
    %v2129 = vpack.c.b16 %v2115, %v2114
    %v2130 = vpack.c.b16 %v2117, %v2116
    %v2131 = vpack.c.b16 %v2119, %v2118
    %v2132 = vpack.c.b16 %v2121, %v2120
    %v2133 = vpack.c.b16 %v2123, %v2122
    %v2134 = vpack.c.b16 %v2125, %v2124
    %v2135 = vpack.c.b16 %v2127, %v2126
    %2144 = vmatpush.bf16.msra.mxu0 %v2135
    %2145 = vmatpush.bf16.msra.mxu0 %v2134
    %2146 = vmatpush.bf16.msra.mxu0 %v2133
    %2147 = vmatpush.bf16.msra.mxu0 %v2132
    %2148 = vmatpush.bf16.msra.mxu0 %v2131
    %2149 = vmatpush.bf16.msra.mxu0 %v2130
    %2150 = vmatpush.bf16.msra.mxu0 %v2129
    %2151 = vmatpush.bf16.msra.mxu0 %v2128
    %2152 = vmatmul.bf16.gmra.mxu0 %v2066
    %v2153 = vpop.f32.mrf.mxu0
    %v2154 = vadd.f32 %v2094, %v2153
    %v2155 = vpop.f32.mrf.mxu0
    %v2156 = vadd.f32 %v2094, %v2155
    %2157 = vmatmul.bf16.gmra.mxu0 %v2067
    %v2158 = vpop.f32.mrf.mxu0
    %v2159 = vadd.f32 %v2094, %v2158
    %v2160 = vpop.f32.mrf.mxu0
    %v2161 = vadd.f32 %v2094, %v2160
    %2162 = vmatmul.bf16.gmra.mxu0 %v2068
    %v2163 = vpop.f32.mrf.mxu0
    %v2164 = vadd.f32 %v2094, %v2163
    %v2165 = vpop.f32.mrf.mxu0
    %v2166 = vadd.f32 %v2094, %v2165
    %2167 = vmatmul.bf16.gmra.mxu0 %v2069
    %v2168 = vpop.f32.mrf.mxu0
    %v2169 = vadd.f32 %v2094, %v2168
    %v2170 = vpop.f32.mrf.mxu0
    %v2171 = vadd.f32 %v2094, %v2170
    %2172 = vmatmul.bf16.gmra.mxu0 %v2070
    %v2173 = vpop.f32.mrf.mxu0
    %v2174 = vadd.f32 %v2094, %v2173
    %v2175 = vpop.f32.mrf.mxu0
    %v2176 = vadd.f32 %v2094, %v2175
    %2177 = vmatmul.bf16.gmra.mxu0 %v2071
    %v2178 = vpop.f32.mrf.mxu0
    %v2179 = vadd.f32 %v2094, %v2178
    %v2180 = vpop.f32.mrf.mxu0
    %v2181 = vadd.f32 %v2094, %v2180
    %2182 = vmatmul.bf16.gmra.mxu0 %v2072
    %v2183 = vpop.f32.mrf.mxu0
    %v2184 = vadd.f32 %v2094, %v2183
    %v2185 = vpop.f32.mrf.mxu0
    %v2186 = vadd.f32 %v2094, %v2185
    %2187 = vmatmul.bf16.gmra.mxu0 %v2073
    %v2188 = vpop.f32.mrf.mxu0
    %v2189 = vadd.f32 %v2094, %v2188
    %v2190 = vpop.f32.mrf.mxu0
    %v2191 = vadd.f32 %v2094, %v2190
    %2192 = vdwg.mxu0
    %v2193 = vmax.f32 %v2154, 0.0
    %v2194 = vmax.f32 %v2156, 0.0
    %v2195 = vmax.f32 %v2159, 0.0
    %v2196 = vmax.f32 %v2161, 0.0
    %v2197 = vmax.f32 %v2164, 0.0
    %v2198 = vmax.f32 %v2166, 0.0
    %v2199 = vmax.f32 %v2169, 0.0
    %v2200 = vmax.f32 %v2171, 0.0
    %v2201 = vmax.f32 %v2174, 0.0
    %v2202 = vmax.f32 %v2176, 0.0
    %v2203 = vmax.f32 %v2179, 0.0
    %v2204 = vmax.f32 %v2181, 0.0
    %v2205 = vmax.f32 %v2184, 0.0
    %v2206 = vmax.f32 %v2186, 0.0
    %v2207 = vmax.f32 %v2189, 0.0
    %v2208 = vmax.f32 %v2191, 0.0
    %v2209 = vpack.c.bf16 %v2194, %v2193
    %v2210 = vpack.c.bf16 %v2196, %v2195
    %v2211 = vpack.c.bf16 %v2198, %v2197
    %v2212 = vpack.c.bf16 %v2200, %v2199
    %v2213 = vpack.c.bf16 %v2202, %v2201
    %v2214 = vpack.c.bf16 %v2204, %v2203
    %v2215 = vpack.c.bf16 %v2206, %v2205
    %v2216 = vpack.c.bf16 %v2208, %v2207
    %2217 = vmatpush.bf16.msra.mxu0 %v2216
    %2218 = vmatpush.bf16.msra.mxu0 %v2215
    %2219 = vmatpush.bf16.msra.mxu0 %v2214
    %2220 = vmatpush.bf16.msra.mxu0 %v2213
    %2221 = vmatpush.bf16.msra.mxu0 %v2212
    %2222 = vmatpush.bf16.msra.mxu0 %v2211
    %2223 = vmatpush.bf16.msra.mxu0 %v2210
    %2224 = vmatpush.bf16.msra.mxu0 %v2209
    %2225 = vmatmul.bf16.gmra.mxu0 %v198
    %v2226 = vpop.f32.mrf.mxu0
    %v2227 = vadd.f32 0.0, %v2226
    %v2228 = vpop.f32.mrf.mxu0
    %v2229 = vadd.f32 0.0, %v2228
    %2230 = vmatmul.bf16.gmra.mxu0 %v199
    %v2231 = vpop.f32.mrf.mxu0
    %v2232 = vadd.f32 0.0, %v2231
    %v2233 = vpop.f32.mrf.mxu0
    %v2234 = vadd.f32 0.0, %v2233
    %2235 = vmatmul.bf16.gmra.mxu0 %v200
    %v2236 = vpop.f32.mrf.mxu0
    %v2237 = vadd.f32 0.0, %v2236
    %v2238 = vpop.f32.mrf.mxu0
    %v2239 = vadd.f32 0.0, %v2238
    %2240 = vmatmul.bf16.gmra.mxu0 %v201
    %v2241 = vpop.f32.mrf.mxu0
    %v2242 = vadd.f32 0.0, %v2241
    %v2243 = vpop.f32.mrf.mxu0
    %v2244 = vadd.f32 0.0, %v2243
    %2245 = vmatmul.bf16.gmra.mxu0 %v202
    %v2246 = vpop.f32.mrf.mxu0
    %v2247 = vadd.f32 0.0, %v2246
    %v2248 = vpop.f32.mrf.mxu0
    %v2249 = vadd.f32 0.0, %v2248
    %2250 = vmatmul.bf16.gmra.mxu0 %v203
    %v2251 = vpop.f32.mrf.mxu0
    %v2252 = vadd.f32 0.0, %v2251
    %v2253 = vpop.f32.mrf.mxu0
    %v2254 = vadd.f32 0.0, %v2253
    %2255 = vmatmul.bf16.gmra.mxu0 %v204
    %v2256 = vpop.f32.mrf.mxu0
    %v2257 = vadd.f32 0.0, %v2256
    %v2258 = vpop.f32.mrf.mxu0
    %v2259 = vadd.f32 0.0, %v2258
    %2260 = vmatmul.bf16.gmra.mxu0 %v205
    %v2261 = vpop.f32.mrf.mxu0
    %v2262 = vadd.f32 0.0, %v2261
    %v2263 = vpop.f32.mrf.mxu0
    %v2264 = vadd.f32 0.0, %v2263
    %2265 = vdwg.mxu0
    %v2266 = vadd.f32 %v2193, %v2227
    %v2267 = vadd.f32 %v2194, %v2229
    %v2268 = vadd.f32 %v2195, %v2232
    %v2269 = vadd.f32 %v2196, %v2234
    %v2270 = vadd.f32 %v2197, %v2237
    %v2271 = vadd.f32 %v2198, %v2239
    %v2272 = vadd.f32 %v2199, %v2242
    %v2273 = vadd.f32 %v2200, %v2244
    %v2274 = vadd.f32 %v2201, %v2247
    %v2275 = vadd.f32 %v2202, %v2249
    %v2276 = vadd.f32 %v2203, %v2252
    %v2277 = vadd.f32 %v2204, %v2254
    %v2278 = vadd.f32 %v2205, %v2257
    %v2279 = vadd.f32 %v2206, %v2259
    %v2280 = vadd.f32 %v2207, %v2262
    %v2281 = vadd.f32 %v2208, %v2264
    %v2282 = vpack.c.bf16 %v2267, %v2266
    %v2283 = vpack.c.bf16 %v2269, %v2268
    %v2284 = vpack.c.bf16 %v2271, %v2270
    %v2285 = vpack.c.bf16 %v2273, %v2272
    %v2286 = vpack.c.bf16 %v2275, %v2274
    %v2287 = vpack.c.bf16 %v2277, %v2276
    %v2288 = vpack.c.bf16 %v2279, %v2278
    %v2289 = vpack.c.bf16 %v2281, %v2280
    %s2290 = scalar_lea.vmem [#allocation6], 256
    %v2291 = vld [vmem:[%s2290] sm:$0xf]
    %v2292 = vld [vmem:[%s2290 + $0x4] sm:$0xf]
    %v2293 = vld [vmem:[%s2290 + $0x8] sm:$0xf]
    %v2294 = vld [vmem:[%s2290 + $0xc] sm:$0xf]
    %v2295 = vld [vmem:[%s2290 + $0x10] sm:$0xf]
    %v2296 = vld [vmem:[%s2290 + $0x14] sm:$0xf]
    %v2297 = vld [vmem:[%s2290 + $0x18] sm:$0xf]
    %v2298 = vld [vmem:[%s2290 + $0x1c] sm:$0xf]
    %v2299 = vld [vmem:[%s2290 + $0x20] sm:$0xf]
    %v2300 = vld [vmem:[%s2290 + $0x24] sm:$0xf]
    %v2301 = vld [vmem:[%s2290 + $0x28] sm:$0xf]
    %v2302 = vld [vmem:[%s2290 + $0x2c] sm:$0xf]
    %v2303 = vld [vmem:[%s2290 + $0x30] sm:$0xf]
    %v2304 = vld [vmem:[%s2290 + $0x34] sm:$0xf]
    %v2305 = vld [vmem:[%s2290 + $0x38] sm:$0xf]
    %v2306 = vld [vmem:[%s2290 + $0x3c] sm:$0xf]
    %v2323 = vunpack.c.l.b16 %v2291
    %v2324 = vunpack.c.l.b16 %v2292
    %v2325 = vunpack.c.l.b16 %v2293
    %v2326 = vunpack.c.l.b16 %v2294
    %v2327 = vunpack.c.l.b16 %v2295
    %v2328 = vunpack.c.l.b16 %v2296
    %v2329 = vunpack.c.l.b16 %v2297
    %v2330 = vunpack.c.l.b16 %v2298
    %v2331 = vunpack.c.l.b16 %v2299
    %v2332 = vunpack.c.l.b16 %v2300
    %v2333 = vunpack.c.l.b16 %v2301
    %v2334 = vunpack.c.l.b16 %v2302
    %v2335 = vunpack.c.l.b16 %v2303
    %v2336 = vunpack.c.l.b16 %v2304
    %v2337 = vunpack.c.l.b16 %v2305
    %v2338 = vunpack.c.l.b16 %v2306
    %v2339 = vpack.c.b16 %v2324, %v2323
    %v2340 = vpack.c.b16 %v2326, %v2325
    %v2341 = vpack.c.b16 %v2328, %v2327
    %v2342 = vpack.c.b16 %v2330, %v2329
    %v2343 = vpack.c.b16 %v2332, %v2331
    %v2344 = vpack.c.b16 %v2334, %v2333
    %v2345 = vpack.c.b16 %v2336, %v2335
    %v2346 = vpack.c.b16 %v2338, %v2337
    %2355 = vmatpush.bf16.msra.mxu0 %v2346
    %2356 = vmatpush.bf16.msra.mxu0 %v2345
    %2357 = vmatpush.bf16.msra.mxu0 %v2344
    %2358 = vmatpush.bf16.msra.mxu0 %v2343
    %2359 = vmatpush.bf16.msra.mxu0 %v2342
    %2360 = vmatpush.bf16.msra.mxu0 %v2341
    %2361 = vmatpush.bf16.msra.mxu0 %v2340
    %2362 = vmatpush.bf16.msra.mxu0 %v2339
    %2363 = vmatmul.bf16.gmra.mxu0 %v2282
    %v2364 = vpop.f32.mrf.mxu0
    %v2365 = vadd.f32 0.0, %v2364
    %v2366 = vpop.f32.mrf.mxu0
    %v2367 = vadd.f32 0.0, %v2366
    %2368 = vmatmul.bf16.gmra.mxu0 %v2283
    %v2369 = vpop.f32.mrf.mxu0
    %v2370 = vadd.f32 0.0, %v2369
    %v2371 = vpop.f32.mrf.mxu0
    %v2372 = vadd.f32 0.0, %v2371
    %2373 = vmatmul.bf16.gmra.mxu0 %v2284
    %v2374 = vpop.f32.mrf.mxu0
    %v2375 = vadd.f32 0.0, %v2374
    %v2376 = vpop.f32.mrf.mxu0
    %v2377 = vadd.f32 0.0, %v2376
    %2378 = vmatmul.bf16.gmra.mxu0 %v2285
    %v2379 = vpop.f32.mrf.mxu0
    %v2380 = vadd.f32 0.0, %v2379
    %v2381 = vpop.f32.mrf.mxu0
    %v2382 = vadd.f32 0.0, %v2381
    %2383 = vmatmul.bf16.gmra.mxu0 %v2286
    %v2384 = vpop.f32.mrf.mxu0
    %v2385 = vadd.f32 0.0, %v2384
    %v2386 = vpop.f32.mrf.mxu0
    %v2387 = vadd.f32 0.0, %v2386
    %2388 = vmatmul.bf16.gmra.mxu0 %v2287
    %v2389 = vpop.f32.mrf.mxu0
    %v2390 = vadd.f32 0.0, %v2389
    %v2391 = vpop.f32.mrf.mxu0
    %v2392 = vadd.f32 0.0, %v2391
    %2393 = vmatmul.bf16.gmra.mxu0 %v2288
    %v2394 = vpop.f32.mrf.mxu0
    %v2395 = vadd.f32 0.0, %v2394
    %v2396 = vpop.f32.mrf.mxu0
    %v2397 = vadd.f32 0.0, %v2396
    %2398 = vmatmul.bf16.gmra.mxu0 %v2289
    %v2399 = vpop.f32.mrf.mxu0
    %v2400 = vadd.f32 0.0, %v2399
    %v2401 = vpop.f32.mrf.mxu0
    %v2402 = vadd.f32 0.0, %v2401
    %2403 = vdwg.mxu0
    %v2404 = vadd.f32 %v2365, %v2367
    %v2405 = vadd.f32 %v2404, %v2370
    %v2406 = vadd.f32 %v2405, %v2372
    %v2407 = vadd.f32 %v2406, %v2375
    %v2408 = vadd.f32 %v2407, %v2377
    %v2409 = vadd.f32 %v2408, %v2380
    %v2410 = vadd.f32 %v2409, %v2382
    %v2411 = vadd.f32 %v2410, %v2385
    %v2412 = vadd.f32 %v2411, %v2387
    %v2413 = vadd.f32 %v2412, %v2390
    %v2414 = vadd.f32 %v2413, %v2392
    %v2415 = vadd.f32 %v2414, %v2395
    %v2416 = vadd.f32 %v2415, %v2397
    %v2417 = vadd.f32 %v2416, %v2400
    %v2418 = vadd.f32 %v2417, %v2402
    %v2419 = vrot.slane %v2418, 4
    %v2420 = vadd.f32 %v2418, %v2419
    %v2421 = vrot.slane %v2420, 2
    %v2422 = vadd.f32 %v2420, %v2421
    %v2423 = vrot.slane %v2422, 1
    %v2424 = vadd.f32 %v2422, %v2423
    %v2425 = vmul.f32 %v2365, %v2365
    %v2426 = vmul.f32 %v2367, %v2367
    %v2427 = vmul.f32 %v2370, %v2370
    %v2428 = vmul.f32 %v2372, %v2372
    %v2429 = vmul.f32 %v2375, %v2375
    %v2430 = vmul.f32 %v2377, %v2377
    %v2431 = vmul.f32 %v2380, %v2380
    %v2432 = vmul.f32 %v2382, %v2382
    %v2433 = vmul.f32 %v2385, %v2385
    %v2434 = vmul.f32 %v2387, %v2387
    %v2435 = vmul.f32 %v2390, %v2390
    %v2436 = vmul.f32 %v2392, %v2392
    %v2437 = vmul.f32 %v2395, %v2395
    %v2438 = vmul.f32 %v2397, %v2397
    %v2439 = vmul.f32 %v2400, %v2400
    %v2440 = vmul.f32 %v2402, %v2402
    %v2441 = vadd.f32 %v2425, %v2426
    %v2442 = vadd.f32 %v2441, %v2427
    %v2443 = vadd.f32 %v2442, %v2428
    %v2444 = vadd.f32 %v2443, %v2429
    %v2445 = vadd.f32 %v2444, %v2430
    %v2446 = vadd.f32 %v2445, %v2431
    %v2447 = vadd.f32 %v2446, %v2432
    %v2448 = vadd.f32 %v2447, %v2433
    %v2449 = vadd.f32 %v2448, %v2434
    %v2450 = vadd.f32 %v2449, %v2435
    %v2451 = vadd.f32 %v2450, %v2436
    %v2452 = vadd.f32 %v2451, %v2437
    %v2453 = vadd.f32 %v2452, %v2438
    %v2454 = vadd.f32 %v2453, %v2439
    %v2455 = vadd.f32 %v2454, %v2440
    %v2456 = vrot.slane %v2455, 4
    %v2457 = vadd.f32 %v2455, %v2456
    %v2458 = vrot.slane %v2457, 2
    %v2459 = vadd.f32 %v2457, %v2458
    %v2460 = vrot.slane %v2459, 1
    %v2461 = vadd.f32 %v2459, %v2460
    %v2462 = vmul.f32 %v2424, 0.0078125
    %v2463 = vmul.f32 %v2461, 0.0078125
    %v2464 = vmul.f32 %v2462, %v2462
    %v2465 = vsub.f32 %v2463, %v2464
    %v2466 = vmax.f32 %v2465, 0.0
    %v2467 = vsub.f32 %v2365, %v2462
    %v2468 = vsub.f32 %v2367, %v2462
    %v2469 = vsub.f32 %v2370, %v2462
    %v2470 = vsub.f32 %v2372, %v2462
    %v2471 = vsub.f32 %v2375, %v2462
    %v2472 = vsub.f32 %v2377, %v2462
    %v2473 = vsub.f32 %v2380, %v2462
    %v2474 = vsub.f32 %v2382, %v2462
    %v2475 = vsub.f32 %v2385, %v2462
    %v2476 = vsub.f32 %v2387, %v2462
    %v2477 = vsub.f32 %v2390, %v2462
    %v2478 = vsub.f32 %v2392, %v2462
    %v2479 = vsub.f32 %v2395, %v2462
    %v2480 = vsub.f32 %v2397, %v2462
    %v2481 = vsub.f32 %v2400, %v2462
    %v2482 = vsub.f32 %v2402, %v2462
    %v2483 = vadd.f32 %v2466, 1e-05
    %v2484 = vrsqrt.pop %v2483
    %v2485 = vmul.f32 %v2484, %v2483
    %v2486 = vmul.f32 %v2485, %v2484
    %v2487 = vmul.f32 0.5, %v2486
    %v2488 = vsub.f32 1.5, %v2487
    %v2489 = vmul.f32 %v2484, %v2488
    %vm2490 = vweird.f32 %v2483
    %vm2491 = vweird.f32 %v2484
    %vm2492 = vmor %vm2490, %vm2491
    %v2493 = vsel %vm2492, %v2484, %v2489
    %v2494 = vmul.f32 %v2467, %v2493
    %v2495 = vmul.f32 %v2468, %v2493
    %v2496 = vmul.f32 %v2469, %v2493
    %v2497 = vmul.f32 %v2470, %v2493
    %v2498 = vmul.f32 %v2471, %v2493
    %v2499 = vmul.f32 %v2472, %v2493
    %v2500 = vmul.f32 %v2473, %v2493
    %v2501 = vmul.f32 %v2474, %v2493
    %v2502 = vmul.f32 %v2475, %v2493
    %v2503 = vmul.f32 %v2476, %v2493
    %v2504 = vmul.f32 %v2477, %v2493
    %v2505 = vmul.f32 %v2478, %v2493
    %v2506 = vmul.f32 %v2479, %v2493
    %v2507 = vmul.f32 %v2480, %v2493
    %v2508 = vmul.f32 %v2481, %v2493
    %v2509 = vmul.f32 %v2482, %v2493
    %s2510 = scalar_lea.vmem %s3, 4
    %v2511 = vld [vmem:[%s2510] sm:$0x1]
    %v2513 = vperm.slane %v2511, 0
    %v2515 = vmul.f32 %v2494, %v2513
    %v2516 = vmul.f32 %v2495, %v2513
    %v2517 = vmul.f32 %v2496, %v2513
    %v2518 = vmul.f32 %v2497, %v2513
    %v2519 = vmul.f32 %v2498, %v2513
    %v2520 = vmul.f32 %v2499, %v2513
    %v2521 = vmul.f32 %v2500, %v2513
    %v2522 = vmul.f32 %v2501, %v2513
    %v2523 = vmul.f32 %v2502, %v2513
    %v2524 = vmul.f32 %v2503, %v2513
    %v2525 = vmul.f32 %v2504, %v2513
    %v2526 = vmul.f32 %v2505, %v2513
    %v2527 = vmul.f32 %v2506, %v2513
    %v2528 = vmul.f32 %v2507, %v2513
    %v2529 = vmul.f32 %v2508, %v2513
    %v2530 = vmul.f32 %v2509, %v2513
    %s2531 = scalar_lea.vmem [#allocation7], 4
    %v2532 = vld [vmem:[%s2531] sm:$0x1]
    %v2534 = vperm.slane %v2532, 0
    %v2536 = vadd.f32 %v2515, %v2534
    %v2537 = vadd.f32 %v2516, %v2534
    %v2538 = vadd.f32 %v2517, %v2534
    %v2539 = vadd.f32 %v2518, %v2534
    %v2540 = vadd.f32 %v2519, %v2534
    %v2541 = vadd.f32 %v2520, %v2534
    %v2542 = vadd.f32 %v2521, %v2534
    %v2543 = vadd.f32 %v2522, %v2534
    %v2544 = vadd.f32 %v2523, %v2534
    %v2545 = vadd.f32 %v2524, %v2534
    %v2546 = vadd.f32 %v2525, %v2534
    %v2547 = vadd.f32 %v2526, %v2534
    %v2548 = vadd.f32 %v2527, %v2534
    %v2549 = vadd.f32 %v2528, %v2534
    %v2550 = vadd.f32 %v2529, %v2534
    %v2551 = vadd.f32 %v2530, %v2534
    %v2552 = vmax.f32 %v2536, 0.0
    %v2553 = vmax.f32 %v2537, 0.0
    %v2554 = vmax.f32 %v2538, 0.0
    %v2555 = vmax.f32 %v2539, 0.0
    %v2556 = vmax.f32 %v2540, 0.0
    %v2557 = vmax.f32 %v2541, 0.0
    %v2558 = vmax.f32 %v2542, 0.0
    %v2559 = vmax.f32 %v2543, 0.0
    %v2560 = vmax.f32 %v2544, 0.0
    %v2561 = vmax.f32 %v2545, 0.0
    %v2562 = vmax.f32 %v2546, 0.0
    %v2563 = vmax.f32 %v2547, 0.0
    %v2564 = vmax.f32 %v2548, 0.0
    %v2565 = vmax.f32 %v2549, 0.0
    %v2566 = vmax.f32 %v2550, 0.0
    %v2567 = vmax.f32 %v2551, 0.0
    %v2568 = vpack.c.bf16 %v2553, %v2552
    %v2569 = vpack.c.bf16 %v2555, %v2554
    %v2570 = vpack.c.bf16 %v2557, %v2556
    %v2571 = vpack.c.bf16 %v2559, %v2558
    %v2572 = vpack.c.bf16 %v2561, %v2560
    %v2573 = vpack.c.bf16 %v2563, %v2562
    %v2574 = vpack.c.bf16 %v2565, %v2564
    %v2575 = vpack.c.bf16 %v2567, %v2566
    %s2576 = scalar_lea.vmem [#allocation9], 256
    %v2577 = vld [vmem:[%s2576] sm:$0xf]
    %v2578 = vld [vmem:[%s2576 + $0x4] sm:$0xf]
    %v2579 = vld [vmem:[%s2576 + $0x8] sm:$0xf]
    %v2580 = vld [vmem:[%s2576 + $0xc] sm:$0xf]
    %v2581 = vld [vmem:[%s2576 + $0x10] sm:$0xf]
    %v2582 = vld [vmem:[%s2576 + $0x14] sm:$0xf]
    %v2583 = vld [vmem:[%s2576 + $0x18] sm:$0xf]
    %v2584 = vld [vmem:[%s2576 + $0x1c] sm:$0xf]
    %v2585 = vld [vmem:[%s2576 + $0x20] sm:$0xf]
    %v2586 = vld [vmem:[%s2576 + $0x24] sm:$0xf]
    %v2587 = vld [vmem:[%s2576 + $0x28] sm:$0xf]
    %v2588 = vld [vmem:[%s2576 + $0x2c] sm:$0xf]
    %v2589 = vld [vmem:[%s2576 + $0x30] sm:$0xf]
    %v2590 = vld [vmem:[%s2576 + $0x34] sm:$0xf]
    %v2591 = vld [vmem:[%s2576 + $0x38] sm:$0xf]
    %v2592 = vld [vmem:[%s2576 + $0x3c] sm:$0xf]
    %s2593 = scalar_lea.vmem [#allocation10], 4
    %v2594 = vld [vmem:[%s2593] sm:$0x1]
    %v2596 = vperm.slane %v2594, 0
    %v2614 = vunpack.c.l.b16 %v2577
    %v2615 = vunpack.c.l.b16 %v2578
    %v2616 = vunpack.c.l.b16 %v2579
    %v2617 = vunpack.c.l.b16 %v2580
    %v2618 = vunpack.c.l.b16 %v2581
    %v2619 = vunpack.c.l.b16 %v2582
    %v2620 = vunpack.c.l.b16 %v2583
    %v2621 = vunpack.c.l.b16 %v2584
    %v2622 = vunpack.c.l.b16 %v2585
    %v2623 = vunpack.c.l.b16 %v2586
    %v2624 = vunpack.c.l.b16 %v2587
    %v2625 = vunpack.c.l.b16 %v2588
    %v2626 = vunpack.c.l.b16 %v2589
    %v2627 = vunpack.c.l.b16 %v2590
    %v2628 = vunpack.c.l.b16 %v2591
    %v2629 = vunpack.c.l.b16 %v2592
    %v2630 = vpack.c.b16 %v2615, %v2614
    %v2631 = vpack.c.b16 %v2617, %v2616
    %v2632 = vpack.c.b16 %v2619, %v2618
    %v2633 = vpack.c.b16 %v2621, %v2620
    %v2634 = vpack.c.b16 %v2623, %v2622
    %v2635 = vpack.c.b16 %v2625, %v2624
    %v2636 = vpack.c.b16 %v2627, %v2626
    %v2637 = vpack.c.b16 %v2629, %v2628
    %2646 = vmatpush.bf16.msra.mxu0 %v2637
    %2647 = vmatpush.bf16.msra.mxu0 %v2636
    %2648 = vmatpush.bf16.msra.mxu0 %v2635
    %2649 = vmatpush.bf16.msra.mxu0 %v2634
    %2650 = vmatpush.bf16.msra.mxu0 %v2633
    %2651 = vmatpush.bf16.msra.mxu0 %v2632
    %2652 = vmatpush.bf16.msra.mxu0 %v2631
    %2653 = vmatpush.bf16.msra.mxu0 %v2630
    %2654 = vmatmul.bf16.gmra.mxu0 %v2568
    %v2655 = vpop.f32.mrf.mxu0
    %v2656 = vadd.f32 %v2596, %v2655
    %v2657 = vpop.f32.mrf.mxu0
    %v2658 = vadd.f32 %v2596, %v2657
    %2659 = vmatmul.bf16.gmra.mxu0 %v2569
    %v2660 = vpop.f32.mrf.mxu0
    %v2661 = vadd.f32 %v2596, %v2660
    %v2662 = vpop.f32.mrf.mxu0
    %v2663 = vadd.f32 %v2596, %v2662
    %2664 = vmatmul.bf16.gmra.mxu0 %v2570
    %v2665 = vpop.f32.mrf.mxu0
    %v2666 = vadd.f32 %v2596, %v2665
    %v2667 = vpop.f32.mrf.mxu0
    %v2668 = vadd.f32 %v2596, %v2667
    %2669 = vmatmul.bf16.gmra.mxu0 %v2571
    %v2670 = vpop.f32.mrf.mxu0
    %v2671 = vadd.f32 %v2596, %v2670
    %v2672 = vpop.f32.mrf.mxu0
    %v2673 = vadd.f32 %v2596, %v2672
    %2674 = vmatmul.bf16.gmra.mxu0 %v2572
    %v2675 = vpop.f32.mrf.mxu0
    %v2676 = vadd.f32 %v2596, %v2675
    %v2677 = vpop.f32.mrf.mxu0
    %v2678 = vadd.f32 %v2596, %v2677
    %2679 = vmatmul.bf16.gmra.mxu0 %v2573
    %v2680 = vpop.f32.mrf.mxu0
    %v2681 = vadd.f32 %v2596, %v2680
    %v2682 = vpop.f32.mrf.mxu0
    %v2683 = vadd.f32 %v2596, %v2682
    %2684 = vmatmul.bf16.gmra.mxu0 %v2574
    %v2685 = vpop.f32.mrf.mxu0
    %v2686 = vadd.f32 %v2596, %v2685
    %v2687 = vpop.f32.mrf.mxu0
    %v2688 = vadd.f32 %v2596, %v2687
    %2689 = vmatmul.bf16.gmra.mxu0 %v2575
    %v2690 = vpop.f32.mrf.mxu0
    %v2691 = vadd.f32 %v2596, %v2690
    %v2692 = vpop.f32.mrf.mxu0
    %v2693 = vadd.f32 %v2596, %v2692
    %2694 = vdwg.mxu0
    %v2695 = vmax.f32 %v2656, 0.0
    %v2696 = vmax.f32 %v2658, 0.0
    %v2697 = vmax.f32 %v2661, 0.0
    %v2698 = vmax.f32 %v2663, 0.0
    %v2699 = vmax.f32 %v2666, 0.0
    %v2700 = vmax.f32 %v2668, 0.0
    %v2701 = vmax.f32 %v2671, 0.0
    %v2702 = vmax.f32 %v2673, 0.0
    %v2703 = vmax.f32 %v2676, 0.0
    %v2704 = vmax.f32 %v2678, 0.0
    %v2705 = vmax.f32 %v2681, 0.0
    %v2706 = vmax.f32 %v2683, 0.0
    %v2707 = vmax.f32 %v2686, 0.0
    %v2708 = vmax.f32 %v2688, 0.0
    %v2709 = vmax.f32 %v2691, 0.0
    %v2710 = vmax.f32 %v2693, 0.0
    %v2711 = vld [vmem:[%s7] sm:$0xf]
    %v2712 = vld [vmem:[%s7 + $0x4] sm:$0xf]
    %v2713 = vpack.c.bf16 %v2696, %v2695
    %v2714 = vpack.c.bf16 %v2698, %v2697
    %v2715 = vpack.c.bf16 %v2700, %v2699
    %v2716 = vpack.c.bf16 %v2702, %v2701
    %v2717 = vpack.c.bf16 %v2704, %v2703
    %v2718 = vpack.c.bf16 %v2706, %v2705
    %v2719 = vpack.c.bf16 %v2708, %v2707
    %v2720 = vpack.c.bf16 %v2710, %v2709
    %v2723 = vunpack.c.l.b16 %v2711
    %v2724 = vunpack.c.l.b16 %v2712
    %v2725 = vpack.c.b16 %v2724, %v2723
    %2727 = vmatpush.bf16.msra.mxu0 %v2720
    %2728 = vmatpush.bf16.msra.mxu0 %v2719
    %2729 = vmatpush.bf16.msra.mxu0 %v2718
    %2730 = vmatpush.bf16.msra.mxu0 %v2717
    %2731 = vmatpush.bf16.msra.mxu0 %v2716
    %2732 = vmatpush.bf16.msra.mxu0 %v2715
    %2733 = vmatpush.bf16.msra.mxu0 %v2714
    %2734 = vmatpush.bf16.msra.mxu0 %v2713
    %2735 = vmatmul.bf16.gmra.mxu0 %v2725
    %v2736 = vpop.f32.mrf.mxu0
    %v2737 = vadd.f32 0.0, %v2736
    %v2738 = vpop.f32.mrf.mxu0
    %v2739 = vadd.f32 0.0, %v2738
    %2740 = vdwg.mxu0
    %v2741 = vld [vmem:[%s8] sm:$0xff]
    %v2742 = vld [vmem:[%s8 + $0x8] sm:$0xff]
    %2744 = vset.pattern.permute.xlu0 0
    %2745 = vperm.xlu0 %2744, %v2741
    %v2746 = vpop.permute.xlu0 %2745
    %2749 = vset.pattern.permute.xlu0 0
    %2750 = vperm.xlu0 %2749, %v2742
    %v2751 = vpop.permute.xlu0 %2750
    %v2753 = vmul.f32 %v2737, %v2746
    %v2754 = vmul.f32 %v2739, %v2751
    %2755 = vst [vmem:[%s9] sm:$0xff] %v2753
    %2756 = vst [vmem:[%s9 + $0x8] sm:$0xff] %v2754
    // Predicated region
    $region62: #{gin_forward.1} parent=1 // pred_check
      _
    $region63: #{gin_forward.1} parent=1 // pred_check_branch
      %2758 = sbr.rel (0) target = $region65
    $region64: #{gin_forward.1} parent=1 // pred_region
      _
    $region65: #{gin_forward.1} parent=1 // pred_fallthru
      _
    // Predicated region
    $region66: #{gin_forward.1} parent=1 // pred_check
      _
    $region67: #{gin_forward.1} parent=1 // pred_check_branch
      %2760 = sbr.rel (0) target = $region69
    $region68: #{gin_forward.1} parent=1 // pred_region
      _
    $region69: #{gin_forward.1} parent=1 // pred_fallthru
      _
    %2761 = vsyncpa [#allocation3], 1
    %2762 = vsyncpa [#allocation5], 1
    %2763 = vsyncpa [#allocation8], 1
    %2764 = vsyncpa [#allocation11], 1

</llo_original>
